<compile_context>
chip_gen: v7x
topology: tpu7x:2x2x1
jax: 0.10.0
libtpu: 0.0.40
codegen_flags: <defaults>
</compile_context>

<pallas_src>
import functools

import numpy as np
import jax
import jax.numpy as jnp
from jax.experimental import pallas as pl
from jax.experimental.pallas import tpu as pltpu


# ----------------------------------------------------------------------------
# Fused Pallas kernel: conv1 -> conv2 -> 1x1 classifier -> bilinear 256x256
# ----------------------------------------------------------------------------
def _fused_kernel(x_ref, r1_ref, b1_ref, bias1_ref, r2_ref, b2_ref, bias2_ref,
                  wcls_ref, bcls_ref, awt_ref, ah_ref,
                  out_ref, mid_ref, *, num_classes):
    f32, bf16 = jnp.float32, jnp.bfloat16

    # --- backbone conv1: 3x3 stride-2 pad-1 (Cin -> C1) + ReLU ---------------
    # x layout [H, W*Cin]; output layout [H0, W0*C1].
    # out = relu( sum_i  R1[i] @ x @ B1[i]  + bias1 )   (taps/padding folded in B1)
    x = x_ref[0]                                                    # [H, W*Cin] bf16
    acc = jnp.zeros((r1_ref.shape[1], b1_ref.shape[2]), f32)
    for i in range(r1_ref.shape[0]):                                # 3 tap rows (unrolled)
        rows = jnp.dot(r1_ref[i], x, preferred_element_type=f32)    # exact 0/1 row gather
        acc = acc + jnp.dot(rows.astype(bf16), b1_ref[i],
                            preferred_element_type=f32)
    feat0 = jnp.maximum(acc + bias1_ref[...], 0.0).astype(bf16)     # [H0, W0*C1]

    # --- backbone conv2: 3x3 stride-2 pad-1 (C1 -> C2) + ReLU ----------------
    acc = jnp.zeros((r2_ref.shape[1], b2_ref.shape[2]), f32)
    for i in range(r2_ref.shape[0]):
        rows = jnp.dot(r2_ref[i], feat0, preferred_element_type=f32)
        acc = acc + jnp.dot(rows.astype(bf16), b2_ref[i],
                            preferred_element_type=f32)
    feat1 = jnp.maximum(acc + bias2_ref[...], 0.0)                   # [h1, w1*C2] f32

    mid_ref[0] = feat1        # midsar = feat1 (NHWC-flat layout; wrapper -> NCHW)

    # --- classifier (1x1 conv) + separable bilinear upsample, all in f32 -----
    a_wt = awt_ref[...]                                              # [w1, OW]       f32
    a_h = ah_ref[...]                                                # [TILE_OH, h1]  f32
    for c in range(num_classes):
        logits = jnp.dot(feat1, wcls_ref[c],
                         preferred_element_type=f32) + bcls_ref[c]   # [h1, w1]
        rows_up = jnp.dot(logits, a_wt, preferred_element_type=f32)  # [h1, OW]
        # 256-on-M, 256-on-N matmul; full (8,128)-aligned slab store per class.
        out_ref[0, c, :, :] = jnp.dot(a_h, rows_up,
                                      preferred_element_type=f32)    # [TILE_OH, OW]


def fused_forward(x_hwc, prep_arrays, dims, *, oh_tile=128):
    """One pallas_call computing outsar [N,nc,256,256] and feat1 [N,h1,w1*C2]."""
    N, H, WC = x_hwc.shape
    d = dims
    nc, h1, w1, c2 = d["nc"], d["h1"], d["w1"], d["c2"]
    OH, OW = d["oh"], d["ow"]
    assert OH % oh_tile == 0
    n_t = OH // oh_tile

    a = prep_arrays
    inputs = (x_hwc, a["r1"], a["b1"], a["bias1"], a["r2"], a["b2"], a["bias2"],
              a["wcls"], a["bcls"], a["awt"], a["ah"])

    const3 = lambda n, t: (0, 0, 0)   # grid-invariant parameter blocks
    const2 = lambda n, t: (0, 0)
    in_specs = [
        pl.BlockSpec((1, H, WC), lambda n, t: (n, 0, 0)),            # x, per batch
        pl.BlockSpec(a["r1"].shape, const3),
        pl.BlockSpec(a["b1"].shape, const3),
        pl.BlockSpec(a["bias1"].shape, const2),
        pl.BlockSpec(a["r2"].shape, const3),
        pl.BlockSpec(a["b2"].shape, const3),
        pl.BlockSpec(a["bias2"].shape, const2),
        pl.BlockSpec(a["wcls"].shape, const3),
        pl.BlockSpec(a["bcls"].shape, const3),
        pl.BlockSpec(a["awt"].shape, const2),
        pl.BlockSpec((oh_tile, h1), lambda n, t: (t, 0)),            # A_h row tile
    ]
    out_specs = (
        pl.BlockSpec((1, nc, oh_tile, OW), lambda n, t: (n, 0, t, 0)),  # outsar
        pl.BlockSpec((1, h1, w1 * c2), lambda n, t: (n, 0, 0)),         # feat1 (midsar)
    )
    out_shape = (
        jax.ShapeDtypeStruct((N, nc, OH, OW), jnp.float32),
        jax.ShapeDtypeStruct((N, h1, w1 * c2), jnp.float32),
    )

    # Advisory cost estimate (work is dominated by the 768 KiB/ batch output write).
    param_bytes = sum(int(np.prod(v.shape)) * v.dtype.itemsize for v in a.values())
    flops = 2 * N * n_t * (
        3 * (d["h0"] * H * WC + d["h0"] * WC * d["w0"] * d["c1"])            # conv1
        + 3 * (h1 * d["h0"] * d["w0"] * d["c1"]
               + h1 * d["w0"] * d["c1"] * w1 * c2)                           # conv2
        + nc * (h1 * w1 * c2 * w1 + h1 * w1 * OW + oh_tile * h1 * OW))       # cls + upsample
    bytes_accessed = (N * H * WC * 2 + param_bytes
                      + N * nc * OH * OW * 4 + N * h1 * w1 * c2 * 4)

    return pl.pallas_call(
        functools.partial(_fused_kernel, num_classes=nc),
        out_shape=out_shape,
        grid=(N, n_t),
        in_specs=in_specs,
        out_specs=out_specs,
        compiler_params=pltpu.CompilerParams(
            # Batch axis feeds both v7x TensorCores; the OH-tile axis stays
            # "arbitrary" because the (tiny, idempotently rewritten) feat1
            # output block is revisited across it.  It still gives each core
            # pipeline depth to overlap the output writeback with compute.
            dimension_semantics=("parallel", "arbitrary"),
        ),
        cost_estimate=pl.CostEstimate(flops=int(flops), transcendentals=0,
                                      bytes_accessed=int(bytes_accessed)),
    )(*inputs)


# ----------------------------------------------------------------------------
# One-time host-side parameter preparation (numpy; not on the per-call path)
# ----------------------------------------------------------------------------
def _conv_tap_matrices(w, b, H, W):
    """3x3 stride-2 pad-1 conv as 3 (row-gather, col+channel) matrix pairs.

    Input layout  X  [H,  W*Cin]   (X[h, w*Cin+ci]   = x[ci, h, w])
    Output layout Y  [OH, OW*Cout] (Y[oh, ow*Cout+co])
    Y = relu( sum_i R[i] @ X @ B[i] + bias_row )
    Zero padding is encoded as missing (zero) rows/columns in R / B.
    """
    w = np.asarray(w, np.float32)
    b = np.asarray(b, np.float32)
    Cout, Cin, KH, KW = w.shape
    OH = (H - 1) // 2 + 1
    OW = (W - 1) // 2 + 1
    R = np.zeros((KH, OH, H), np.float32)
    for i in range(KH):
        for oh in range(OH):
            h = 2 * oh + i - 1
            if 0 <= h < H:
                R[i, oh, h] = 1.0
    B = np.zeros((KH, W * Cin, OW * Cout), np.float32)
    for i in range(KH):
        for ow in range(OW):
            for j in range(KW):
                wcol = 2 * ow + j - 1
                if 0 <= wcol < W:
                    B[i, wcol * Cin:(wcol + 1) * Cin,
                      ow * Cout:(ow + 1) * Cout] = w[:, :, i, j].T
    bias_row = np.tile(b, OW)[None, :]                       # [1, OW*Cout]
    return R, B, bias_row, OH, OW


def _classifier_matrices(w_cls, b_cls, w1, C2):
    """1x1 conv on feat1 [h1, w1*C2] -> per-class logits [h1, w1]."""
    w_cls = np.asarray(w_cls, np.float32).reshape(w_cls.shape[0], -1)   # [nc, C2]
    b_cls = np.asarray(b_cls, np.float32)
    nc = w_cls.shape[0]
    M = np.zeros((nc, w1 * C2, w1), np.float32)
    for c in range(nc):
        for w_ in range(w1):
            M[c, w_ * C2:(w_ + 1) * C2, w_] = w_cls[c]
    return M, b_cls.reshape(nc, 1, 1)


def _bilinear_matrix(out_size, in_size):
    """PyTorch F.interpolate(mode='bilinear', align_corners=False) weights [out, in]."""
    scale = in_size / out_size
    i = np.arange(out_size, dtype=np.float64)
    src = np.maximum((i + 0.5) * scale - 0.5, 0.0)
    lo = np.minimum(np.floor(src).astype(np.int64), in_size - 1)
    hi = np.minimum(lo + 1, in_size - 1)
    w_hi = np.clip(src - lo, 0.0, 1.0)
    A = np.zeros((out_size, in_size), np.float32)
    np.add.at(A, (np.arange(out_size), lo), 1.0 - w_hi)
    np.add.at(A, (np.arange(out_size), hi), w_hi)
    return A


def prepare_params(params, H, W, out_size=256):
    """Fold conv taps / padding / layout + classifier + interpolation into
    constant matrices.  Runs once on the host so no per-call glue remains."""
    R1, B1, bias1, H0, W0 = _conv_tap_matrices(params["conv1_w"], params["conv1_b"], H, W)
    R2, B2, bias2, h1, w1 = _conv_tap_matrices(params["conv2_w"], params["conv2_b"], H0, W0)
    c1 = int(params["conv1_w"].shape[0])
    c2 = int(params["conv2_w"].shape[0])
    Wm, bcls = _classifier_matrices(params["cls_w"], params["cls_b"], w1, c2)
    A_h = _bilinear_matrix(out_size, h1)                     # [256, h1] f32
    A_w = _bilinear_matrix(out_size, w1)                     # [256, w1] f32
    arrays = {
        # conv operands in bf16 for the MXU (gather matrices are exact in bf16)
        "r1": jnp.asarray(R1, jnp.bfloat16),
        "b1": jnp.asarray(B1, jnp.bfloat16),
        "bias1": jnp.asarray(bias1, jnp.float32),
        "r2": jnp.asarray(R2, jnp.bfloat16),
        "b2": jnp.asarray(B2, jnp.bfloat16),
        "bias2": jnp.asarray(bias2, jnp.float32),
        # classifier + interpolation kept in f32 (tiny; matches F.interpolate)
        "wcls": jnp.asarray(Wm, jnp.float32),
        "bcls": jnp.asarray(bcls, jnp.float32),
        "awt": jnp.asarray(np.ascontiguousarray(A_w.T), jnp.float32),   # [w1, 256]
        "ah": jnp.asarray(A_h, jnp.float32),                            # [256, h1]
    }
    dims = dict(h0=H0, w0=W0, c1=c1, h1=h1, w1=w1, c2=c2,
                nc=int(params["cls_w"].shape[0]), oh=out_size, ow=out_size)
    return arrays, dims


# ----------------------------------------------------------------------------
# SmallDeepLab forward
# ----------------------------------------------------------------------------
def init_params(key, cin=4, num_classes=3):
    ks = jax.random.split(key, 6)
    return {
        "conv1_w": 0.1 * jax.random.normal(ks[0], (8, cin, 3, 3), jnp.float32),
        "conv1_b": 0.1 * jax.random.normal(ks[1], (8,), jnp.float32),
        "conv2_w": 0.1 * jax.random.normal(ks[2], (16, 8, 3, 3), jnp.float32),
        "conv2_b": 0.1 * jax.random.normal(ks[3], (16,), jnp.float32),
        "cls_w": 0.1 * jax.random.normal(ks[4], (num_classes, 16, 1, 1), jnp.float32),
        "cls_b": 0.1 * jax.random.normal(ks[5], (num_classes,), jnp.float32),
    }


def small_deeplab_forward(x, prep_arrays, dims):
    """x: [N, Cin, H, W] (PyTorch NCHW interface)."""
    N, Cin, H, W = x.shape
    # Only per-call glue: layout change of the 8 KiB input into [H, W*Cin] rows.
    x_hwc = jnp.transpose(x, (0, 2, 3, 1)).reshape(N, H, W * Cin).astype(jnp.bfloat16)
    outsar, feat1_flat = fused_forward(x_hwc, prep_arrays, dims)
    # midsar back to NCHW (tiny: [N, 4, 4, 16] -> [N, 16, 4, 4])
    midsar = jnp.transpose(
        feat1_flat.reshape(N, dims["h1"], dims["w1"], dims["c2"]), (0, 3, 1, 2))
    return {"outsar": outsar, "midsar": midsar}


# ----------------------------------------------------------------------------
# Pure-XLA reference (f32) for a correctness check
# ----------------------------------------------------------------------------
def reference_forward(x, params, out_size=256):
    def conv(z, w, b):
        y = jax.lax.conv_general_dilated(
            z, w, window_strides=(2, 2), padding=((1, 1), (1, 1)),
            dimension_numbers=("NCHW", "OIHW", "NCHW"))
        return jax.nn.relu(y + b[None, :, None, None])
    f0 = conv(x, params["conv1_w"], params["conv1_b"])
    f1 = conv(f0, params["conv2_w"], params["conv2_b"])
    logits = (jnp.einsum("nchw,kc->nkhw", f1, params["cls_w"][:, :, 0, 0])
              + params["cls_b"][None, :, None, None])
    A_h = jnp.asarray(_bilinear_matrix(out_size, f1.shape[2]))
    A_w = jnp.asarray(_bilinear_matrix(out_size, f1.shape[3]))
    out = jnp.einsum("Hh,nkhw,Ww->nkHW", A_h, logits, A_w)
    return {"outsar": out, "midsar": f1}


if __name__ == "__main__":
    key = jax.random.PRNGKey(0)
    k_x, k_p = jax.random.split(key)

    N, CIN, H, W = 2, 4, 16, 16
    NUM_CLASSES = 3
    x = jax.random.normal(k_x, (N, CIN, H, W), jnp.float32)
    params = init_params(k_p, cin=CIN, num_classes=NUM_CLASSES)

    prep_arrays, dims = prepare_params(params, H, W)        # one-time host setup
    fwd = jax.jit(functools.partial(small_deeplab_forward, dims=dims))

    out = fwd(x, prep_arrays)
    jax.block_until_ready(out["outsar"])
    jax.block_until_ready(out["midsar"])

    assert out["outsar"].shape == (N, NUM_CLASSES, 256, 256)
    assert out["midsar"].shape == (N, 16, 4, 4)
    assert out["outsar"].dtype == jnp.float32
    assert out["midsar"].dtype == jnp.float32

    ref = reference_forward(x, params)
    err_out = float(jnp.max(jnp.abs(out["outsar"] - ref["outsar"])))
    err_mid = float(jnp.max(jnp.abs(out["midsar"] - ref["midsar"])))
    assert err_out < 5e-2 and err_mid < 5e-2, (err_out, err_mid)

    print("KERNEL_OK")
</pallas_src>

<mosaic_0001>
module attributes {stable_mosaic.version = 11 : i64} {
  func.func @_fused_kernel(%arg0: i32, %arg1: i32, %arg2: memref<1x16x64xbf16, #tpu.memory_space<vmem>>, %arg3: memref<3x8x16xbf16, #tpu.memory_space<vmem>>, %arg4: memref<3x64x64xbf16, #tpu.memory_space<vmem>>, %arg5: memref<1x64xf32, #tpu.memory_space<vmem>>, %arg6: memref<3x4x8xbf16, #tpu.memory_space<vmem>>, %arg7: memref<3x64x64xbf16, #tpu.memory_space<vmem>>, %arg8: memref<1x64xf32, #tpu.memory_space<vmem>>, %arg9: memref<3x64x4xf32, #tpu.memory_space<vmem>>, %arg10: memref<3x1x1xf32, #tpu.memory_space<vmem>>, %arg11: memref<4x256xf32, #tpu.memory_space<vmem>>, %arg12: memref<128x4xf32, #tpu.memory_space<vmem>>, %arg13: memref<1x3x128x256xf32, #tpu.memory_space<vmem>>, %arg14: memref<1x4x64xf32, #tpu.memory_space<vmem>>) attributes {dimension_semantics = [#tpu.dimension_semantics<parallel>, #tpu.dimension_semantics<arbitrary>], iteration_bounds = array<i64: 2, 2>, scalar_prefetch = 0 : i64, scratch_operands = 0 : i64, tpu.core_type = #tpu.core_type<tc>, window_params = [{transform_indices = @transform_0, window_bounds = array<i64: 1, 16, 64>}, {pipeline_mode = #tpu.pipeline_mode<synchronous>, transform_indices = @transform_1, window_bounds = array<i64: 3, 8, 16>}, {pipeline_mode = #tpu.pipeline_mode<synchronous>, transform_indices = @transform_2, window_bounds = array<i64: 3, 64, 64>}, {pipeline_mode = #tpu.pipeline_mode<synchronous>, transform_indices = @transform_3, window_bounds = array<i64: 1, 64>}, {pipeline_mode = #tpu.pipeline_mode<synchronous>, transform_indices = @transform_4, window_bounds = array<i64: 3, 4, 8>}, {pipeline_mode = #tpu.pipeline_mode<synchronous>, transform_indices = @transform_5, window_bounds = array<i64: 3, 64, 64>}, {pipeline_mode = #tpu.pipeline_mode<synchronous>, transform_indices = @transform_6, window_bounds = array<i64: 1, 64>}, {pipeline_mode = #tpu.pipeline_mode<synchronous>, transform_indices = @transform_7, window_bounds = array<i64: 3, 64, 4>}, {pipeline_mode = #tpu.pipeline_mode<synchronous>, transform_indices = @transform_8, window_bounds = array<i64: 3, 1, 1>}, {pipeline_mode = #tpu.pipeline_mode<synchronous>, transform_indices = @transform_9, window_bounds = array<i64: 4, 256>}, {transform_indices = @transform_10, window_bounds = array<i64: 128, 4>}, {transform_indices = @transform_11, window_bounds = array<i64: 1, 3, 128, 256>}, {transform_indices = @transform_12, window_bounds = array<i64: 1, 4, 64>}]} {
    %c0 = arith.constant 0 : index
    %c0_0 = arith.constant 0 : index
    %c0_1 = arith.constant 0 : index
    %0 = vector.load %arg2[%c0, %c0_0, %c0_1] : memref<1x16x64xbf16, #tpu.memory_space<vmem>>, vector<1x16x64xbf16>
    %1 = vector.shape_cast %0 : vector<1x16x64xbf16> to vector<16x64xbf16>
    %cst = arith.constant 0.000000e+00 : f32
    %2 = vector.broadcast %cst : f32 to vector<8x64xf32>
    %c0_2 = arith.constant 0 : index
    %c0_3 = arith.constant 0 : index
    %c0_4 = arith.constant 0 : index
    %3 = vector.load %arg3[%c0_2, %c0_3, %c0_4] : memref<3x8x16xbf16, #tpu.memory_space<vmem>>, vector<1x8x16xbf16>
    %4 = vector.shape_cast %3 : vector<1x8x16xbf16> to vector<8x16xbf16>
    %cst_5 = arith.constant dense<0.000000e+00> : vector<8x64xf32>
    %5 = tpu.matmul %4, %1, %cst_5 {dimension_numbers = #tpu.dot_dimension_numbers<[1], [0], [0], [1], [0, 0, 1, 1], [], []>} : vector<8x16xbf16>, vector<16x64xbf16>, vector<8x64xf32> -> vector<8x64xf32>
    %6 = arith.truncf %5 : vector<8x64xf32> to vector<8x64xbf16>
    %c0_6 = arith.constant 0 : index
    %c0_7 = arith.constant 0 : index
    %c0_8 = arith.constant 0 : index
    %7 = vector.load %arg4[%c0_6, %c0_7, %c0_8] : memref<3x64x64xbf16, #tpu.memory_space<vmem>>, vector<1x64x64xbf16>
    %8 = vector.shape_cast %7 : vector<1x64x64xbf16> to vector<64x64xbf16>
    %cst_9 = arith.constant dense<0.000000e+00> : vector<8x64xf32>
    %9 = tpu.matmul %6, %8, %cst_9 {dimension_numbers = #tpu.dot_dimension_numbers<[1], [0], [0], [1], [0, 0, 1, 1], [], []>} : vector<8x64xbf16>, vector<64x64xbf16>, vector<8x64xf32> -> vector<8x64xf32>
    %10 = arith.addf %2, %9 : vector<8x64xf32>
    %c1 = arith.constant 1 : index
    %c0_10 = arith.constant 0 : index
    %c0_11 = arith.constant 0 : index
    %11 = vector.load %arg3[%c1, %c0_10, %c0_11] : memref<3x8x16xbf16, #tpu.memory_space<vmem>>, vector<1x8x16xbf16>
    %12 = vector.shape_cast %11 : vector<1x8x16xbf16> to vector<8x16xbf16>
    %cst_12 = arith.constant dense<0.000000e+00> : vector<8x64xf32>
    %13 = tpu.matmul %12, %1, %cst_12 {dimension_numbers = #tpu.dot_dimension_numbers<[1], [0], [0], [1], [0, 0, 1, 1], [], []>} : vector<8x16xbf16>, vector<16x64xbf16>, vector<8x64xf32> -> vector<8x64xf32>
    %14 = arith.truncf %13 : vector<8x64xf32> to vector<8x64xbf16>
    %c1_13 = arith.constant 1 : index
    %c0_14 = arith.constant 0 : index
    %c0_15 = arith.constant 0 : index
    %15 = vector.load %arg4[%c1_13, %c0_14, %c0_15] : memref<3x64x64xbf16, #tpu.memory_space<vmem>>, vector<1x64x64xbf16>
    %16 = vector.shape_cast %15 : vector<1x64x64xbf16> to vector<64x64xbf16>
    %cst_16 = arith.constant dense<0.000000e+00> : vector<8x64xf32>
    %17 = tpu.matmul %14, %16, %cst_16 {dimension_numbers = #tpu.dot_dimension_numbers<[1], [0], [0], [1], [0, 0, 1, 1], [], []>} : vector<8x64xbf16>, vector<64x64xbf16>, vector<8x64xf32> -> vector<8x64xf32>
    %18 = arith.addf %10, %17 : vector<8x64xf32>
    %c2 = arith.constant 2 : index
    %c0_17 = arith.constant 0 : index
    %c0_18 = arith.constant 0 : index
    %19 = vector.load %arg3[%c2, %c0_17, %c0_18] : memref<3x8x16xbf16, #tpu.memory_space<vmem>>, vector<1x8x16xbf16>
    %20 = vector.shape_cast %19 : vector<1x8x16xbf16> to vector<8x16xbf16>
    %cst_19 = arith.constant dense<0.000000e+00> : vector<8x64xf32>
    %21 = tpu.matmul %20, %1, %cst_19 {dimension_numbers = #tpu.dot_dimension_numbers<[1], [0], [0], [1], [0, 0, 1, 1], [], []>} : vector<8x16xbf16>, vector<16x64xbf16>, vector<8x64xf32> -> vector<8x64xf32>
    %22 = arith.truncf %21 : vector<8x64xf32> to vector<8x64xbf16>
    %c2_20 = arith.constant 2 : index
    %c0_21 = arith.constant 0 : index
    %c0_22 = arith.constant 0 : index
    %23 = vector.load %arg4[%c2_20, %c0_21, %c0_22] : memref<3x64x64xbf16, #tpu.memory_space<vmem>>, vector<1x64x64xbf16>
    %24 = vector.shape_cast %23 : vector<1x64x64xbf16> to vector<64x64xbf16>
    %cst_23 = arith.constant dense<0.000000e+00> : vector<8x64xf32>
    %25 = tpu.matmul %22, %24, %cst_23 {dimension_numbers = #tpu.dot_dimension_numbers<[1], [0], [0], [1], [0, 0, 1, 1], [], []>} : vector<8x64xbf16>, vector<64x64xbf16>, vector<8x64xf32> -> vector<8x64xf32>
    %26 = arith.addf %18, %25 : vector<8x64xf32>
    %c0_24 = arith.constant 0 : index
    %c0_25 = arith.constant 0 : index
    %27 = vector.load %arg5[%c0_24, %c0_25] : memref<1x64xf32, #tpu.memory_space<vmem>>, vector<1x64xf32>
    %28 = vector.broadcast %27 : vector<1x64xf32> to vector<8x64xf32>
    %29 = arith.addf %26, %28 : vector<8x64xf32>
    %cst_26 = arith.constant 0.000000e+00 : f32
    %30 = vector.broadcast %cst_26 : f32 to vector<8x64xf32>
    %31 = arith.maximumf %29, %30 : vector<8x64xf32>
    %32 = arith.truncf %31 : vector<8x64xf32> to vector<8x64xbf16>
    %cst_27 = arith.constant 0.000000e+00 : f32
    %33 = vector.broadcast %cst_27 : f32 to vector<4x64xf32>
    %c0_28 = arith.constant 0 : index
    %c0_29 = arith.constant 0 : index
    %c0_30 = arith.constant 0 : index
    %34 = vector.load %arg6[%c0_28, %c0_29, %c0_30] : memref<3x4x8xbf16, #tpu.memory_space<vmem>>, vector<1x4x8xbf16>
    %35 = vector.shape_cast %34 : vector<1x4x8xbf16> to vector<4x8xbf16>
    %cst_31 = arith.constant dense<0.000000e+00> : vector<4x64xf32>
    %36 = tpu.matmul %35, %32, %cst_31 {dimension_numbers = #tpu.dot_dimension_numbers<[1], [0], [0], [1], [0, 0, 1, 1], [], []>} : vector<4x8xbf16>, vector<8x64xbf16>, vector<4x64xf32> -> vector<4x64xf32>
    %37 = arith.truncf %36 : vector<4x64xf32> to vector<4x64xbf16>
    %c0_32 = arith.constant 0 : index
    %c0_33 = arith.constant 0 : index
    %c0_34 = arith.constant 0 : index
    %38 = vector.load %arg7[%c0_32, %c0_33, %c0_34] : memref<3x64x64xbf16, #tpu.memory_space<vmem>>, vector<1x64x64xbf16>
    %39 = vector.shape_cast %38 : vector<1x64x64xbf16> to vector<64x64xbf16>
    %cst_35 = arith.constant dense<0.000000e+00> : vector<4x64xf32>
    %40 = tpu.matmul %37, %39, %cst_35 {dimension_numbers = #tpu.dot_dimension_numbers<[1], [0], [0], [1], [0, 0, 1, 1], [], []>} : vector<4x64xbf16>, vector<64x64xbf16>, vector<4x64xf32> -> vector<4x64xf32>
    %41 = arith.addf %33, %40 : vector<4x64xf32>
    %c1_36 = arith.constant 1 : index
    %c0_37 = arith.constant 0 : index
    %c0_38 = arith.constant 0 : index
    %42 = vector.load %arg6[%c1_36, %c0_37, %c0_38] : memref<3x4x8xbf16, #tpu.memory_space<vmem>>, vector<1x4x8xbf16>
    %43 = vector.shape_cast %42 : vector<1x4x8xbf16> to vector<4x8xbf16>
    %cst_39 = arith.constant dense<0.000000e+00> : vector<4x64xf32>
    %44 = tpu.matmul %43, %32, %cst_39 {dimension_numbers = #tpu.dot_dimension_numbers<[1], [0], [0], [1], [0, 0, 1, 1], [], []>} : vector<4x8xbf16>, vector<8x64xbf16>, vector<4x64xf32> -> vector<4x64xf32>
    %45 = arith.truncf %44 : vector<4x64xf32> to vector<4x64xbf16>
    %c1_40 = arith.constant 1 : index
    %c0_41 = arith.constant 0 : index
    %c0_42 = arith.constant 0 : index
    %46 = vector.load %arg7[%c1_40, %c0_41, %c0_42] : memref<3x64x64xbf16, #tpu.memory_space<vmem>>, vector<1x64x64xbf16>
    %47 = vector.shape_cast %46 : vector<1x64x64xbf16> to vector<64x64xbf16>
    %cst_43 = arith.constant dense<0.000000e+00> : vector<4x64xf32>
    %48 = tpu.matmul %45, %47, %cst_43 {dimension_numbers = #tpu.dot_dimension_numbers<[1], [0], [0], [1], [0, 0, 1, 1], [], []>} : vector<4x64xbf16>, vector<64x64xbf16>, vector<4x64xf32> -> vector<4x64xf32>
    %49 = arith.addf %41, %48 : vector<4x64xf32>
    %c2_44 = arith.constant 2 : index
    %c0_45 = arith.constant 0 : index
    %c0_46 = arith.constant 0 : index
    %50 = vector.load %arg6[%c2_44, %c0_45, %c0_46] : memref<3x4x8xbf16, #tpu.memory_space<vmem>>, vector<1x4x8xbf16>
    %51 = vector.shape_cast %50 : vector<1x4x8xbf16> to vector<4x8xbf16>
    %cst_47 = arith.constant dense<0.000000e+00> : vector<4x64xf32>
    %52 = tpu.matmul %51, %32, %cst_47 {dimension_numbers = #tpu.dot_dimension_numbers<[1], [0], [0], [1], [0, 0, 1, 1], [], []>} : vector<4x8xbf16>, vector<8x64xbf16>, vector<4x64xf32> -> vector<4x64xf32>
    %53 = arith.truncf %52 : vector<4x64xf32> to vector<4x64xbf16>
    %c2_48 = arith.constant 2 : index
    %c0_49 = arith.constant 0 : index
    %c0_50 = arith.constant 0 : index
    %54 = vector.load %arg7[%c2_48, %c0_49, %c0_50] : memref<3x64x64xbf16, #tpu.memory_space<vmem>>, vector<1x64x64xbf16>
    %55 = vector.shape_cast %54 : vector<1x64x64xbf16> to vector<64x64xbf16>
    %cst_51 = arith.constant dense<0.000000e+00> : vector<4x64xf32>
    %56 = tpu.matmul %53, %55, %cst_51 {dimension_numbers = #tpu.dot_dimension_numbers<[1], [0], [0], [1], [0, 0, 1, 1], [], []>} : vector<4x64xbf16>, vector<64x64xbf16>, vector<4x64xf32> -> vector<4x64xf32>
    %57 = arith.addf %49, %56 : vector<4x64xf32>
    %c0_52 = arith.constant 0 : index
    %c0_53 = arith.constant 0 : index
    %58 = vector.load %arg8[%c0_52, %c0_53] : memref<1x64xf32, #tpu.memory_space<vmem>>, vector<1x64xf32>
    %59 = vector.broadcast %58 : vector<1x64xf32> to vector<4x64xf32>
    %60 = arith.addf %57, %59 : vector<4x64xf32>
    %cst_54 = arith.constant 0.000000e+00 : f32
    %61 = vector.broadcast %cst_54 : f32 to vector<4x64xf32>
    %62 = arith.maximumf %60, %61 : vector<4x64xf32>
    %c0_55 = arith.constant 0 : index
    %c0_56 = arith.constant 0 : index
    %c0_57 = arith.constant 0 : index
    %63 = vector.load %arg14[%c0_55, %c0_56, %c0_57] : memref<1x4x64xf32, #tpu.memory_space<vmem>>, vector<1x4x64xf32>
    %64 = vector.shape_cast %63 : vector<1x4x64xf32> to vector<4x64xf32>
    %65 = vector.shape_cast %62 : vector<4x64xf32> to vector<1x4x64xf32>
    tpu.vector_store %arg14[%c0_55, %c0_56, %c0_57], %65 {strides = array<i32>} : memref<1x4x64xf32, #tpu.memory_space<vmem>>, vector<1x4x64xf32>,
    %c0_58 = arith.constant 0 : index
    %c0_59 = arith.constant 0 : index
    %66 = vector.load %arg11[%c0_58, %c0_59] : memref<4x256xf32, #tpu.memory_space<vmem>>, vector<4x256xf32>
    %c0_60 = arith.constant 0 : index
    %c0_61 = arith.constant 0 : index
    %67 = vector.load %arg12[%c0_60, %c0_61] : memref<128x4xf32, #tpu.memory_space<vmem>>, vector<128x4xf32>
    %c0_62 = arith.constant 0 : index
    %c0_63 = arith.constant 0 : index
    %c0_64 = arith.constant 0 : index
    %68 = vector.load %arg9[%c0_62, %c0_63, %c0_64] : memref<3x64x4xf32, #tpu.memory_space<vmem>>, vector<1x64x4xf32>
    %69 = vector.shape_cast %68 : vector<1x64x4xf32> to vector<64x4xf32>
    %cst_65 = arith.constant dense<0.000000e+00> : vector<4x4xf32>
    %70 = tpu.matmul %62, %69, %cst_65 {dimension_numbers = #tpu.dot_dimension_numbers<[1], [0], [0], [1], [0, 0, 1, 1], [], []>} : vector<4x64xf32>, vector<64x4xf32>, vector<4x4xf32> -> vector<4x4xf32>
    %c0_66 = arith.constant 0 : index
    %c0_67 = arith.constant 0 : index
    %c0_68 = arith.constant 0 : index
    %71 = vector.load %arg10[%c0_66, %c0_67, %c0_68] : memref<3x1x1xf32, #tpu.memory_space<vmem>>, vector<1x1x1xf32>
    %72 = vector.shape_cast %71 : vector<1x1x1xf32> to vector<1x1xf32>
    %73 = vector.broadcast %72 : vector<1x1xf32> to vector<4x4xf32>
    %74 = arith.addf %70, %73 : vector<4x4xf32>
    %cst_69 = arith.constant dense<0.000000e+00> : vector<4x256xf32>
    %75 = tpu.matmul %74, %66, %cst_69 {dimension_numbers = #tpu.dot_dimension_numbers<[1], [0], [0], [1], [0, 0, 1, 1], [], []>} : vector<4x4xf32>, vector<4x256xf32>, vector<4x256xf32> -> vector<4x256xf32>
    %cst_70 = arith.constant dense<0.000000e+00> : vector<128x256xf32>
    %76 = tpu.matmul %67, %75, %cst_70 {dimension_numbers = #tpu.dot_dimension_numbers<[1], [0], [0], [1], [0, 0, 1, 1], [], []>} : vector<128x4xf32>, vector<4x256xf32>, vector<128x256xf32> -> vector<128x256xf32>
    %c0_71 = arith.constant 0 : index
    %c0_72 = arith.constant 0 : index
    %c0_73 = arith.constant 0 : index
    %c0_74 = arith.constant 0 : index
    %77 = vector.load %arg13[%c0_71, %c0_72, %c0_73, %c0_74] : memref<1x3x128x256xf32, #tpu.memory_space<vmem>>, vector<1x1x128x256xf32>
    %78 = vector.shape_cast %77 : vector<1x1x128x256xf32> to vector<128x256xf32>
    %79 = vector.shape_cast %76 : vector<128x256xf32> to vector<1x1x128x256xf32>
    tpu.vector_store %arg13[%c0_71, %c0_72, %c0_73, %c0_74], %79 {strides = array<i32>} : memref<1x3x128x256xf32, #tpu.memory_space<vmem>>, vector<1x1x128x256xf32>,
    %c1_75 = arith.constant 1 : index
    %c0_76 = arith.constant 0 : index
    %c0_77 = arith.constant 0 : index
    %80 = vector.load %arg9[%c1_75, %c0_76, %c0_77] : memref<3x64x4xf32, #tpu.memory_space<vmem>>, vector<1x64x4xf32>
    %81 = vector.shape_cast %80 : vector<1x64x4xf32> to vector<64x4xf32>
    %cst_78 = arith.constant dense<0.000000e+00> : vector<4x4xf32>
    %82 = tpu.matmul %62, %81, %cst_78 {dimension_numbers = #tpu.dot_dimension_numbers<[1], [0], [0], [1], [0, 0, 1, 1], [], []>} : vector<4x64xf32>, vector<64x4xf32>, vector<4x4xf32> -> vector<4x4xf32>
    %c1_79 = arith.constant 1 : index
    %c0_80 = arith.constant 0 : index
    %c0_81 = arith.constant 0 : index
    %83 = vector.load %arg10[%c1_79, %c0_80, %c0_81] : memref<3x1x1xf32, #tpu.memory_space<vmem>>, vector<1x1x1xf32>
    %84 = vector.shape_cast %83 : vector<1x1x1xf32> to vector<1x1xf32>
    %85 = vector.broadcast %84 : vector<1x1xf32> to vector<4x4xf32>
    %86 = arith.addf %82, %85 : vector<4x4xf32>
    %cst_82 = arith.constant dense<0.000000e+00> : vector<4x256xf32>
    %87 = tpu.matmul %86, %66, %cst_82 {dimension_numbers = #tpu.dot_dimension_numbers<[1], [0], [0], [1], [0, 0, 1, 1], [], []>} : vector<4x4xf32>, vector<4x256xf32>, vector<4x256xf32> -> vector<4x256xf32>
    %cst_83 = arith.constant dense<0.000000e+00> : vector<128x256xf32>
    %88 = tpu.matmul %67, %87, %cst_83 {dimension_numbers = #tpu.dot_dimension_numbers<[1], [0], [0], [1], [0, 0, 1, 1], [], []>} : vector<128x4xf32>, vector<4x256xf32>, vector<128x256xf32> -> vector<128x256xf32>
    %c0_84 = arith.constant 0 : index
    %c1_85 = arith.constant 1 : index
    %c0_86 = arith.constant 0 : index
    %c0_87 = arith.constant 0 : index
    %89 = vector.load %arg13[%c0_84, %c1_85, %c0_86, %c0_87] : memref<1x3x128x256xf32, #tpu.memory_space<vmem>>, vector<1x1x128x256xf32>
    %90 = vector.shape_cast %89 : vector<1x1x128x256xf32> to vector<128x256xf32>
    %91 = vector.shape_cast %88 : vector<128x256xf32> to vector<1x1x128x256xf32>
    tpu.vector_store %arg13[%c0_84, %c1_85, %c0_86, %c0_87], %91 {strides = array<i32>} : memref<1x3x128x256xf32, #tpu.memory_space<vmem>>, vector<1x1x128x256xf32>,
    %c2_88 = arith.constant 2 : index
    %c0_89 = arith.constant 0 : index
    %c0_90 = arith.constant 0 : index
    %92 = vector.load %arg9[%c2_88, %c0_89, %c0_90] : memref<3x64x4xf32, #tpu.memory_space<vmem>>, vector<1x64x4xf32>
    %93 = vector.shape_cast %92 : vector<1x64x4xf32> to vector<64x4xf32>
    %cst_91 = arith.constant dense<0.000000e+00> : vector<4x4xf32>
    %94 = tpu.matmul %62, %93, %cst_91 {dimension_numbers = #tpu.dot_dimension_numbers<[1], [0], [0], [1], [0, 0, 1, 1], [], []>} : vector<4x64xf32>, vector<64x4xf32>, vector<4x4xf32> -> vector<4x4xf32>
    %c2_92 = arith.constant 2 : index
    %c0_93 = arith.constant 0 : index
    %c0_94 = arith.constant 0 : index
    %95 = vector.load %arg10[%c2_92, %c0_93, %c0_94] : memref<3x1x1xf32, #tpu.memory_space<vmem>>, vector<1x1x1xf32>
    %96 = vector.shape_cast %95 : vector<1x1x1xf32> to vector<1x1xf32>
    %97 = vector.broadcast %96 : vector<1x1xf32> to vector<4x4xf32>
    %98 = arith.addf %94, %97 : vector<4x4xf32>
    %cst_95 = arith.constant dense<0.000000e+00> : vector<4x256xf32>
    %99 = tpu.matmul %98, %66, %cst_95 {dimension_numbers = #tpu.dot_dimension_numbers<[1], [0], [0], [1], [0, 0, 1, 1], [], []>} : vector<4x4xf32>, vector<4x256xf32>, vector<4x256xf32> -> vector<4x256xf32>
    %cst_96 = arith.constant dense<0.000000e+00> : vector<128x256xf32>
    %100 = tpu.matmul %67, %99, %cst_96 {dimension_numbers = #tpu.dot_dimension_numbers<[1], [0], [0], [1], [0, 0, 1, 1], [], []>} : vector<128x4xf32>, vector<4x256xf32>, vector<128x256xf32> -> vector<128x256xf32>
    %c0_97 = arith.constant 0 : index
    %c2_98 = arith.constant 2 : index
    %c0_99 = arith.constant 0 : index
    %c0_100 = arith.constant 0 : index
    %101 = vector.load %arg13[%c0_97, %c2_98, %c0_99, %c0_100] : memref<1x3x128x256xf32, #tpu.memory_space<vmem>>, vector<1x1x128x256xf32>
    %102 = vector.shape_cast %101 : vector<1x1x128x256xf32> to vector<128x256xf32>
    %103 = vector.shape_cast %100 : vector<128x256xf32> to vector<1x1x128x256xf32>
    tpu.vector_store %arg13[%c0_97, %c2_98, %c0_99, %c0_100], %103 {strides = array<i32>} : memref<1x3x128x256xf32, #tpu.memory_space<vmem>>, vector<1x1x128x256xf32>,
    return
  }
  func.func @transform_0(%arg0: i32, %arg1: i32) -> (i32, i32, i32) {
    %c0_i32 = arith.constant 0 : i32
    %c0_i32_0 = arith.constant 0 : i32
    %c0_i32_1 = arith.constant 0 : i32
    return %arg0, %c0_i32, %c0_i32_0 : i32, i32, i32
  }
  func.func @transform_1(%arg0: i32, %arg1: i32) -> (i32, i32, i32) {
    %c0_i32 = arith.constant 0 : i32
    %c0_i32_0 = arith.constant 0 : i32
    %c0_i32_1 = arith.constant 0 : i32
    %c0_i32_2 = arith.constant 0 : i32
    return %c0_i32, %c0_i32_0, %c0_i32_1 : i32, i32, i32
  }
  func.func @transform_2(%arg0: i32, %arg1: i32) -> (i32, i32, i32) {
    %c0_i32 = arith.constant 0 : i32
    %c0_i32_0 = arith.constant 0 : i32
    %c0_i32_1 = arith.constant 0 : i32
    %c0_i32_2 = arith.constant 0 : i32
    return %c0_i32, %c0_i32_0, %c0_i32_1 : i32, i32, i32
  }
  func.func @transform_3(%arg0: i32, %arg1: i32) -> (i32, i32) {
    %c0_i32 = arith.constant 0 : i32
    %c0_i32_0 = arith.constant 0 : i32
    %c0_i32_1 = arith.constant 0 : i32
    return %c0_i32, %c0_i32_0 : i32, i32
  }
  func.func @transform_4(%arg0: i32, %arg1: i32) -> (i32, i32, i32) {
    %c0_i32 = arith.constant 0 : i32
    %c0_i32_0 = arith.constant 0 : i32
    %c0_i32_1 = arith.constant 0 : i32
    %c0_i32_2 = arith.constant 0 : i32
    return %c0_i32, %c0_i32_0, %c0_i32_1 : i32, i32, i32
  }
  func.func @transform_5(%arg0: i32, %arg1: i32) -> (i32, i32, i32) {
    %c0_i32 = arith.constant 0 : i32
    %c0_i32_0 = arith.constant 0 : i32
    %c0_i32_1 = arith.constant 0 : i32
    %c0_i32_2 = arith.constant 0 : i32
    return %c0_i32, %c0_i32_0, %c0_i32_1 : i32, i32, i32
  }
  func.func @transform_6(%arg0: i32, %arg1: i32) -> (i32, i32) {
    %c0_i32 = arith.constant 0 : i32
    %c0_i32_0 = arith.constant 0 : i32
    %c0_i32_1 = arith.constant 0 : i32
    return %c0_i32, %c0_i32_0 : i32, i32
  }
  func.func @transform_7(%arg0: i32, %arg1: i32) -> (i32, i32, i32) {
    %c0_i32 = arith.constant 0 : i32
    %c0_i32_0 = arith.constant 0 : i32
    %c0_i32_1 = arith.constant 0 : i32
    %c0_i32_2 = arith.constant 0 : i32
    return %c0_i32, %c0_i32_0, %c0_i32_1 : i32, i32, i32
  }
  func.func @transform_8(%arg0: i32, %arg1: i32) -> (i32, i32, i32) {
    %c0_i32 = arith.constant 0 : i32
    %c0_i32_0 = arith.constant 0 : i32
    %c0_i32_1 = arith.constant 0 : i32
    %c0_i32_2 = arith.constant 0 : i32
    return %c0_i32, %c0_i32_0, %c0_i32_1 : i32, i32, i32
  }
  func.func @transform_9(%arg0: i32, %arg1: i32) -> (i32, i32) {
    %c0_i32 = arith.constant 0 : i32
    %c0_i32_0 = arith.constant 0 : i32
    %c0_i32_1 = arith.constant 0 : i32
    return %c0_i32, %c0_i32_0 : i32, i32
  }
  func.func @transform_10(%arg0: i32, %arg1: i32) -> (i32, i32) {
    %c0_i32 = arith.constant 0 : i32
    %c0_i32_0 = arith.constant 0 : i32
    return %arg1, %c0_i32 : i32, i32
  }
  func.func @transform_11(%arg0: i32, %arg1: i32) -> (i32, i32, i32, i32) {
    %c0_i32 = arith.constant 0 : i32
    %c0_i32_0 = arith.constant 0 : i32
    %c0_i32_1 = arith.constant 0 : i32
    return %arg0, %c0_i32, %arg1, %c0_i32_0 : i32, i32, i32, i32
  }
  func.func @transform_12(%arg0: i32, %arg1: i32) -> (i32, i32, i32) {
    %c0_i32 = arith.constant 0 : i32
    %c0_i32_0 = arith.constant 0 : i32
    %c0_i32_1 = arith.constant 0 : i32
    return %arg0, %c0_i32, %c0_i32_0 : i32, i32, i32
  }
}

</mosaic_0001>

<llo_original>
// kernel: small_deeplab_forward.1
$region0: #{small_deeplab_forward.1}
  #allocation0 [shape = 'u32[]', space=smem, size = 0x4, offset = 0x4, fixed_abs, tag = 'smem constant byte address 0x4 - core index']
  #allocation1 [shape = 'u32[144,128]{1,0:T(1,128)}', space=vmem, size = 0x12000, scoped, tag = 'internal scratch']
  #allocation15 [shape = 's32[]', space=sflag, size = 0x4, offset = 0, fixed_abs, tag = 'sflag constant byte address 0x0 - dummy sync flag']
  %s0 = inlined_call_operand.vmem [shape: bf16[2,16,64], index: 0, kind: input, shape index: {}]
  %s1 = inlined_call_operand.hbm [shape: bf16[3,8,16], index: 1, kind: input, shape index: {}]
  %s2 = inlined_call_operand.hbm [shape: bf16[3,64,64], index: 2, kind: input, shape index: {}]
  %s3 = inlined_call_operand.hbm [shape: f32[1,64], index: 3, kind: input, shape index: {}]
  %s4 = inlined_call_operand.hbm [shape: bf16[3,4,8], index: 4, kind: input, shape index: {}]
  %s5 = inlined_call_operand.hbm [shape: bf16[3,64,64], index: 5, kind: input, shape index: {}]
  %s6 = inlined_call_operand.hbm [shape: f32[1,64], index: 6, kind: input, shape index: {}]
  %s7 = inlined_call_operand.vmem [shape: f32[3,64,4], index: 7, kind: input, shape index: {}]
  %s8 = inlined_call_operand.vmem [shape: f32[3,1,1], index: 8, kind: input, shape index: {}]
  %s9 = inlined_call_operand.hbm [shape: f32[4,256], index: 9, kind: input, shape index: {}]
  %s10 = inlined_call_operand.vmem [shape: f32[256,4], index: 10, kind: input, shape index: {}]
  %s11 = inlined_call_operand.hbm [shape: f32[2,3,256,256], index: 11, kind: output, shape index: {0}]
  %s12 = inlined_call_operand.vmem [shape: f32[2,4,64], index: 12, kind: output, shape index: {1}]
  %13 = xla_tuple %s11, %s12
  %s14 = sld [smem:[#allocation0]]
  $region113: #{small_deeplab_forward.1} parent=0
    _
  %s16 = ssub.s32 1, %s14
  %s17 = scalar_select 0, %s16, %s14
  $region1: #{small_deeplab_forward.1} parent=0
    #allocation2 [shape = 'u8[6144]{0}', space=vmem, size = 0x1800, scoped, tag = 'input window, operand 1, single buffered']
    #allocation3 [shape = 's32[2]{0}', space=sflag, size = 0x8, scoped, tag = 'scoped memory for small_deeplab_forward.1']
    #allocation4 [shape = 's32[2]{0}', space=sflag, size = 0x8, scoped, tag = 'scoped memory for small_deeplab_forward.1']
    #allocation5 [shape = 'u8[49152]{0}', space=vmem, size = 0xc000, scoped, tag = 'input window, operand 2, single buffered']
    #allocation6 [shape = 's32[1]{0}', space=sflag, size = 0x4, scoped, tag = 'scoped memory for small_deeplab_forward.1']
    #allocation7 [shape = 'u8[512]{0}', space=vmem, size = 0x400, scoped, tag = 'input window, operand 3, single buffered']
    #allocation8 [shape = 'u8[3072]{0}', space=vmem, size = 0xc00, scoped, tag = 'input window, operand 4, single buffered']
    #allocation9 [shape = 's32[1]{0}', space=sflag, size = 0x4, scoped, tag = 'scoped memory for small_deeplab_forward.1']
    #allocation10 [shape = 'u8[49152]{0}', space=vmem, size = 0xc000, scoped, tag = 'input window, operand 5, single buffered']
    #allocation11 [shape = 'u8[512]{0}', space=vmem, size = 0x400, scoped, tag = 'input window, operand 6, single buffered']
    #allocation12 [shape = 's32[1]{0}', space=sflag, size = 0x4, scoped, tag = 'scoped memory for small_deeplab_forward.1']
    #allocation13 [shape = 'u8[4096]{0}', space=vmem, size = 0x1000, scoped, tag = 'input window, operand 9, single buffered']
    #allocation14 [shape = 'u8[786432]{0}', space=vmem, size = 0xc0000, scoped, tag = 'output window, operand 0']
    %18 = vsyncpa [#allocation3], 0
    %19 = vsyncpa [#allocation6], 0
    %20 = vsyncpa [#allocation9], 0
    %21 = vsyncpa [#allocation12], 0
    %22 = vsyncpa [#allocation4], 0
    %s23 = scalar_lea.sflag [#allocation4], 1
    %24 = vsyncpa %s23, 0
    loop: start=0, step=1, limit=6
    $region2: #{small_deeplab_forward.1} parent=1 // loop_pre_header
      _
    $region3: #{small_deeplab_forward.1} parent=1 // loop_header
      %s26 = sphi 0, %s30
      %p27 = scmp.ge.s32.totalorder %s26, 6
      %s33 = sphi 0, %s45
      %s34 = sphi 0, %s41
      %s35 = sphi 0, %s33
      %s36 = sphi 0, %s34
      %s37 = sphi 0, %s35
      %s38 = sphi 0, %s36
      %s48 = sphi 0, %s50
      %s51 = sphi 0, %s48
      %s52 = sphi 0, %s51
      %s68 = sphi 0, %s52
      %s72 = sphi 0, %s72
      %s74 = sphi 0, %s72
      %s75 = sphi 0, %s74
      %s89 = sphi 0, %s75
      %s93 = sphi 0, %s93
      %s95 = sphi 0, %s93
      %s96 = sphi 0, %s95
      %s110 = sphi 0, %s96
      %s114 = sphi 0, %s114
      %s116 = sphi 0, %s114
      %s117 = sphi 0, %s116
      %s131 = sphi 0, %s117
      %s135 = sphi 0, %s135
      %s137 = sphi 0, %s135
      %s138 = sphi 0, %s137
      %s152 = sphi 0, %s138
      %s156 = sphi 0, %s156
      %s158 = sphi 0, %s156
      %s159 = sphi 0, %s158
      %s173 = sphi 0, %s159
      %s177 = sphi 0, %s177
      %s179 = sphi 0, %s177
      %s180 = sphi 0, %s179
      %s194 = sphi 0, %s180
      %s198 = sphi 0, %s198
      %s200 = sphi 0, %s198
      %s201 = sphi 0, %s200
      %s215 = sphi 0, %s201
      %s219 = sphi 0, %s219
      %s221 = sphi 0, %s219
      %s222 = sphi 0, %s221
      %s236 = sphi 0, %s222
      %s240 = sphi 0, %s240
      %s242 = sphi 0, %s240
      %s243 = sphi 0, %s242
      %s257 = sphi 0, %s243
      %s263 = sphi 0, %s265
      %s266 = sphi 0, %s263
      %s267 = sphi 0, %s266
      %s283 = sphi 0, %s267
      %s291 = sphi 0, %s293
      %s294 = sphi 0, %s291
      %s295 = sphi 0, %s294
      %s311 = sphi 0, %s295
      %s317 = sphi 0, %s319
      %s320 = sphi 0, %s317
      %s321 = sphi 0, %s320
      %s337 = sphi 0, %s321
    $region4: #{small_deeplab_forward.1} parent=1 // loop_header_branch
      %29 = sbr.rel (%p27) target = $region8
    $region5: #{small_deeplab_forward.1} parent=1 // loop_body
      %s31 = ssub.s32 %s26, 1
      %s32 = ssub.s32 %s26, 2
      %s39 = sadd.s32 1, %s34
      %p40 = scmp.ge.s32.totalorder %s39, 2
      %s41 = scalar_select %p40, 0, %s39
      %s42 = sadd.s32 1, %s33
      %s43 = scalar_select %p40, %s42, %s33
      %p44 = scmp.ge.s32.totalorder %s43, 2
      %s45 = scalar_select %p44, 0, %s43
      %s46 = ssub.s32 %s33, %s45
      %p47 = scmp.eq.s32.totalorder %s46, 0
      %s49 = sadd.s32 %s48, 1
      %s50 = scalar_select %p47, %s48, %s49
      %p53 = pneg %p47
      %p54 = scmp.eq.s32.totalorder %s26, 3
      %p55 = por %p53, %p54
      %p56 = scmp.ne.s32.totalorder %s48, %s51
      %p57 = scmp.eq.s32.totalorder %s26, 0
      %p58 = por %p56, %p57
      %p59 = scmp.ne.s32.totalorder %s48, %s51
      %p60 = scmp.eq.s32.totalorder %s31, 3
      %p61 = por %p59, %p60
      %p62 = scmp.ne.s32.totalorder %s51, %s52
      %p63 = scmp.eq.s32.totalorder %s31, 0
      %p64 = por %p62, %p63
      %p65 = scmp.ne.s32.totalorder %s51, %s52
      %p66 = scmp.eq.s32.totalorder %s32, 3
      %p67 = por %p65, %p66
      %p69 = scmp.ne.s32.totalorder %s52, %s68
      %p70 = scmp.eq.s32.totalorder %s32, 0
      %p71 = por %p69, %p70
      %s73 = sadd.s32 %s72, 1
      %p76 = scmp.eq.s32.totalorder %s26, 3
      %p77 = scmp.ne.s32.totalorder %s72, %s74
      %p78 = scmp.eq.s32.totalorder %s26, 0
      %p79 = por %p77, %p78
      %p80 = scmp.ne.s32.totalorder %s72, %s74
      %p81 = scmp.eq.s32.totalorder %s31, 3
      %p82 = por %p80, %p81
      %p83 = scmp.ne.s32.totalorder %s74, %s75
      %p84 = scmp.eq.s32.totalorder %s31, 0
      %p85 = por %p83, %p84
      %p86 = scmp.ne.s32.totalorder %s74, %s75
      %p87 = scmp.eq.s32.totalorder %s32, 3
      %p88 = por %p86, %p87
      %p90 = scmp.ne.s32.totalorder %s75, %s89
      %p91 = scmp.eq.s32.totalorder %s32, 0
      %p92 = por %p90, %p91
      %s94 = sadd.s32 %s93, 1
      %p97 = scmp.eq.s32.totalorder %s26, 3
      %p98 = scmp.ne.s32.totalorder %s93, %s95
      %p99 = scmp.eq.s32.totalorder %s26, 0
      %p100 = por %p98, %p99
      %p101 = scmp.ne.s32.totalorder %s93, %s95
      %p102 = scmp.eq.s32.totalorder %s31, 3
      %p103 = por %p101, %p102
      %p104 = scmp.ne.s32.totalorder %s95, %s96
      %p105 = scmp.eq.s32.totalorder %s31, 0
      %p106 = por %p104, %p105
      %p107 = scmp.ne.s32.totalorder %s95, %s96
      %p108 = scmp.eq.s32.totalorder %s32, 3
      %p109 = por %p107, %p108
      %p111 = scmp.ne.s32.totalorder %s96, %s110
      %p112 = scmp.eq.s32.totalorder %s32, 0
      %p113 = por %p111, %p112
      %s115 = sadd.s32 %s114, 1
      %p118 = scmp.eq.s32.totalorder %s26, 3
      %p119 = scmp.ne.s32.totalorder %s114, %s116
      %p120 = scmp.eq.s32.totalorder %s26, 0
      %p121 = por %p119, %p120
      %p122 = scmp.ne.s32.totalorder %s114, %s116
      %p123 = scmp.eq.s32.totalorder %s31, 3
      %p124 = por %p122, %p123
      %p125 = scmp.ne.s32.totalorder %s116, %s117
      %p126 = scmp.eq.s32.totalorder %s31, 0
      %p127 = por %p125, %p126
      %p128 = scmp.ne.s32.totalorder %s116, %s117
      %p129 = scmp.eq.s32.totalorder %s32, 3
      %p130 = por %p128, %p129
      %p132 = scmp.ne.s32.totalorder %s117, %s131
      %p133 = scmp.eq.s32.totalorder %s32, 0
      %p134 = por %p132, %p133
      %s136 = sadd.s32 %s135, 1
      %p139 = scmp.eq.s32.totalorder %s26, 3
      %p140 = scmp.ne.s32.totalorder %s135, %s137
      %p141 = scmp.eq.s32.totalorder %s26, 0
      %p142 = por %p140, %p141
      %p143 = scmp.ne.s32.totalorder %s135, %s137
      %p144 = scmp.eq.s32.totalorder %s31, 3
      %p145 = por %p143, %p144
      %p146 = scmp.ne.s32.totalorder %s137, %s138
      %p147 = scmp.eq.s32.totalorder %s31, 0
      %p148 = por %p146, %p147
      %p149 = scmp.ne.s32.totalorder %s137, %s138
      %p150 = scmp.eq.s32.totalorder %s32, 3
      %p151 = por %p149, %p150
      %p153 = scmp.ne.s32.totalorder %s138, %s152
      %p154 = scmp.eq.s32.totalorder %s32, 0
      %p155 = por %p153, %p154
      %s157 = sadd.s32 %s156, 1
      %p160 = scmp.eq.s32.totalorder %s26, 3
      %p161 = scmp.ne.s32.totalorder %s156, %s158
      %p162 = scmp.eq.s32.totalorder %s26, 0
      %p163 = por %p161, %p162
      %p164 = scmp.ne.s32.totalorder %s156, %s158
      %p165 = scmp.eq.s32.totalorder %s31, 3
      %p166 = por %p164, %p165
      %p167 = scmp.ne.s32.totalorder %s158, %s159
      %p168 = scmp.eq.s32.totalorder %s31, 0
      %p169 = por %p167, %p168
      %p170 = scmp.ne.s32.totalorder %s158, %s159
      %p171 = scmp.eq.s32.totalorder %s32, 3
      %p172 = por %p170, %p171
      %p174 = scmp.ne.s32.totalorder %s159, %s173
      %p175 = scmp.eq.s32.totalorder %s32, 0
      %p176 = por %p174, %p175
      %s178 = sadd.s32 %s177, 1
      %p181 = scmp.eq.s32.totalorder %s26, 3
      %p182 = scmp.ne.s32.totalorder %s177, %s179
      %p183 = scmp.eq.s32.totalorder %s26, 0
      %p184 = por %p182, %p183
      %p185 = scmp.ne.s32.totalorder %s177, %s179
      %p186 = scmp.eq.s32.totalorder %s31, 3
      %p187 = por %p185, %p186
      %p188 = scmp.ne.s32.totalorder %s179, %s180
      %p189 = scmp.eq.s32.totalorder %s31, 0
      %p190 = por %p188, %p189
      %p191 = scmp.ne.s32.totalorder %s179, %s180
      %p192 = scmp.eq.s32.totalorder %s32, 3
      %p193 = por %p191, %p192
      %p195 = scmp.ne.s32.totalorder %s180, %s194
      %p196 = scmp.eq.s32.totalorder %s32, 0
      %p197 = por %p195, %p196
      %s199 = sadd.s32 %s198, 1
      %p202 = scmp.eq.s32.totalorder %s26, 3
      %p203 = scmp.ne.s32.totalorder %s198, %s200
      %p204 = scmp.eq.s32.totalorder %s26, 0
      %p205 = por %p203, %p204
      %p206 = scmp.ne.s32.totalorder %s198, %s200
      %p207 = scmp.eq.s32.totalorder %s31, 3
      %p208 = por %p206, %p207
      %p209 = scmp.ne.s32.totalorder %s200, %s201
      %p210 = scmp.eq.s32.totalorder %s31, 0
      %p211 = por %p209, %p210
      %p212 = scmp.ne.s32.totalorder %s200, %s201
      %p213 = scmp.eq.s32.totalorder %s32, 3
      %p214 = por %p212, %p213
      %p216 = scmp.ne.s32.totalorder %s201, %s215
      %p217 = scmp.eq.s32.totalorder %s32, 0
      %p218 = por %p216, %p217
      %s220 = sadd.s32 %s219, 1
      %p223 = scmp.eq.s32.totalorder %s26, 3
      %p224 = scmp.ne.s32.totalorder %s219, %s221
      %p225 = scmp.eq.s32.totalorder %s26, 0
      %p226 = por %p224, %p225
      %p227 = scmp.ne.s32.totalorder %s219, %s221
      %p228 = scmp.eq.s32.totalorder %s31, 3
      %p229 = por %p227, %p228
      %p230 = scmp.ne.s32.totalorder %s221, %s222
      %p231 = scmp.eq.s32.totalorder %s31, 0
      %p232 = por %p230, %p231
      %p233 = scmp.ne.s32.totalorder %s221, %s222
      %p234 = scmp.eq.s32.totalorder %s32, 3
      %p235 = por %p233, %p234
      %p237 = scmp.ne.s32.totalorder %s222, %s236
      %p238 = scmp.eq.s32.totalorder %s32, 0
      %p239 = por %p237, %p238
      %s241 = sadd.s32 %s240, 1
      %p244 = scmp.eq.s32.totalorder %s26, 3
      %p245 = scmp.ne.s32.totalorder %s240, %s242
      %p246 = scmp.eq.s32.totalorder %s26, 0
      %p247 = por %p245, %p246
      %p248 = scmp.ne.s32.totalorder %s240, %s242
      %p249 = scmp.eq.s32.totalorder %s31, 3
      %p250 = por %p248, %p249
      %p251 = scmp.ne.s32.totalorder %s242, %s243
      %p252 = scmp.eq.s32.totalorder %s31, 0
      %p253 = por %p251, %p252
      %p254 = scmp.ne.s32.totalorder %s242, %s243
      %p255 = scmp.eq.s32.totalorder %s32, 3
      %p256 = por %p254, %p255
      %p258 = scmp.ne.s32.totalorder %s243, %s257
      %p259 = scmp.eq.s32.totalorder %s32, 0
      %p260 = por %p258, %p259
      %s261 = ssub.s32 %s34, %s41
      %p262 = scmp.eq.s32.totalorder %s261, 0
      %s264 = sadd.s32 %s263, 1
      %s265 = scalar_select %p262, %s263, %s264
      %p268 = pneg %p262
      %p269 = scmp.eq.s32.totalorder %s26, 3
      %p270 = por %p268, %p269
      %p271 = scmp.ne.s32.totalorder %s263, %s266
      %p272 = scmp.eq.s32.totalorder %s26, 0
      %p273 = por %p271, %p272
      %p274 = scmp.ne.s32.totalorder %s263, %s266
      %p275 = scmp.eq.s32.totalorder %s31, 3
      %p276 = por %p274, %p275
      %p277 = scmp.ne.s32.totalorder %s266, %s267
      %p278 = scmp.eq.s32.totalorder %s31, 0
      %p279 = por %p277, %p278
      %p280 = scmp.ne.s32.totalorder %s266, %s267
      %p281 = scmp.eq.s32.totalorder %s32, 3
      %p282 = por %p280, %p281
      %p284 = scmp.ne.s32.totalorder %s267, %s283
      %p285 = scmp.eq.s32.totalorder %s32, 0
      %p286 = por %p284, %p285
      %s287 = ssub.s32 %s33, %s45
      %s288 = ssub.s32 %s34, %s41
      %s289 = sor.u32 %s287, %s288
      %p290 = scmp.eq.s32.totalorder %s289, 0
      %s292 = sadd.s32 %s291, 1
      %s293 = scalar_select %p290, %s291, %s292
      %p296 = pneg %p290
      %p297 = scmp.eq.s32.totalorder %s26, 3
      %p298 = por %p296, %p297
      %p299 = scmp.ne.s32.totalorder %s291, %s294
      %p300 = scmp.eq.s32.totalorder %s26, 0
      %p301 = por %p299, %p300
      %p302 = scmp.ne.s32.totalorder %s291, %s294
      %p303 = scmp.eq.s32.totalorder %s31, 3
      %p304 = por %p302, %p303
      %p305 = scmp.ne.s32.totalorder %s294, %s295
      %p306 = scmp.eq.s32.totalorder %s31, 0
      %p307 = por %p305, %p306
      %p308 = scmp.ne.s32.totalorder %s294, %s295
      %p309 = scmp.eq.s32.totalorder %s32, 3
      %p310 = por %p308, %p309
      %p312 = scmp.ne.s32.totalorder %s295, %s311
      %p313 = scmp.eq.s32.totalorder %s32, 0
      %p314 = por %p312, %p313
      %s315 = ssub.s32 %s33, %s45
      %p316 = scmp.eq.s32.totalorder %s315, 0
      %s318 = sadd.s32 %s317, 1
      %s319 = scalar_select %p316, %s317, %s318
      %p322 = pneg %p316
      %p323 = scmp.eq.s32.totalorder %s26, 3
      %p324 = por %p322, %p323
      %p325 = scmp.ne.s32.totalorder %s317, %s320
      %p326 = scmp.eq.s32.totalorder %s26, 0
      %p327 = por %p325, %p326
      %p328 = scmp.ne.s32.totalorder %s317, %s320
      %p329 = scmp.eq.s32.totalorder %s31, 3
      %p330 = por %p328, %p329
      %p331 = scmp.ne.s32.totalorder %s320, %s321
      %p332 = scmp.eq.s32.totalorder %s31, 0
      %p333 = por %p331, %p332
      %p334 = scmp.ne.s32.totalorder %s320, %s321
      %p335 = scmp.eq.s32.totalorder %s32, 3
      %p336 = por %p334, %p335
      %p338 = scmp.ne.s32.totalorder %s321, %s337
      %p339 = scmp.eq.s32.totalorder %s32, 0
      %p340 = por %p338, %p339
      %p341 = scmp.le.s32.totalorder 1, %s26
      %p342 = scmp.lt.s32.totalorder %s26, 5
      %p343 = pnand %p341, %p342
      %p344 = pneg %p343
      // Predicated region
      $region9: #{small_deeplab_forward.1} parent=5 // pred_check
        _
      $region10: #{small_deeplab_forward.1} parent=5 // pred_check_branch
        %346 = sbr.rel (%p343) target = $region12
      $region11: #{small_deeplab_forward.1} parent=5 // pred_region
        %s347 = ssub.s32 %s26, 1
        // Predicated region
        $region13: #{small_deeplab_forward.1} parent=11 // pred_check
          %p348 = pneg %p85
        $region14: #{small_deeplab_forward.1} parent=11 // pred_check_branch
          %350 = sbr.rel (%p348) target = $region16
        $region15: #{small_deeplab_forward.1} parent=11 // pred_region
          %s352 = ssub.s32 192, 192
          %353 = vsyncadd [#allocation3], %s352
          %s354 = sshll.u32 [#allocation2], 4
          %s355 = int_to_ptr.vmem [resolvable:$true] %s354
          %360 = dma.hbm_to_vmem [thread:$0]  %s1, 192, %s355, [#allocation3], 64, 64, 4
        $region16: #{small_deeplab_forward.1} parent=11 // pred_fallthru
          _
        // Predicated region
        $region17: #{small_deeplab_forward.1} parent=11 // pred_check
          %p361 = pneg %p106
        $region18: #{small_deeplab_forward.1} parent=11 // pred_check_branch
          %363 = sbr.rel (%p361) target = $region20
        $region19: #{small_deeplab_forward.1} parent=11 // pred_region
          %s365 = ssub.s32 1536, 1536
          %366 = vsyncadd [#allocation6], %s365
          %s367 = sshll.u32 [#allocation5], 4
          %s368 = int_to_ptr.vmem [resolvable:$true] %s367
          %373 = dma.hbm_to_vmem [thread:$0]  %s2, 1536, %s368, [#allocation6], 64, 64, 4
        $region20: #{small_deeplab_forward.1} parent=11 // pred_fallthru
          _
        // Predicated region
        $region21: #{small_deeplab_forward.1} parent=11 // pred_check
          %p374 = pneg %p127
        $region22: #{small_deeplab_forward.1} parent=11 // pred_check_branch
          %376 = sbr.rel (%p374) target = $region24
        $region23: #{small_deeplab_forward.1} parent=11 // pred_region
          %s378 = ssub.s32 16, 16
          %379 = vsyncadd [#allocation6], %s378
          %s381 = sshll.u32 [#allocation7], 4
          %s382 = int_to_ptr.vmem [resolvable:$true] %s381
          %384 = dma.hbm_to_vmem [thread:$0]  %s3, 16, %s382, [#allocation6]
        $region24: #{small_deeplab_forward.1} parent=11 // pred_fallthru
          _
        // Predicated region
        $region25: #{small_deeplab_forward.1} parent=11 // pred_check
          %p385 = pneg %p148
        $region26: #{small_deeplab_forward.1} parent=11 // pred_check_branch
          %387 = sbr.rel (%p385) target = $region28
        $region27: #{small_deeplab_forward.1} parent=11 // pred_region
          %s389 = ssub.s32 96, 96
          %390 = vsyncadd [#allocation9], %s389
          %s391 = sshll.u32 [#allocation8], 4
          %s392 = int_to_ptr.vmem [resolvable:$true] %s391
          %397 = dma.hbm_to_vmem [thread:$0]  %s4, 96, %s392, [#allocation9], 32, 32, 2
        $region28: #{small_deeplab_forward.1} parent=11 // pred_fallthru
          _
        // Predicated region
        $region29: #{small_deeplab_forward.1} parent=11 // pred_check
          %p398 = pneg %p169
        $region30: #{small_deeplab_forward.1} parent=11 // pred_check_branch
          %400 = sbr.rel (%p398) target = $region32
        $region31: #{small_deeplab_forward.1} parent=11 // pred_region
          %s402 = ssub.s32 1536, 1536
          %403 = vsyncadd [#allocation9], %s402
          %s404 = sshll.u32 [#allocation10], 4
          %s405 = int_to_ptr.vmem [resolvable:$true] %s404
          %410 = dma.hbm_to_vmem [thread:$0]  %s5, 1536, %s405, [#allocation9], 64, 64, 4
        $region32: #{small_deeplab_forward.1} parent=11 // pred_fallthru
          _
        // Predicated region
        $region33: #{small_deeplab_forward.1} parent=11 // pred_check
          %p411 = pneg %p190
        $region34: #{small_deeplab_forward.1} parent=11 // pred_check_branch
          %413 = sbr.rel (%p411) target = $region36
        $region35: #{small_deeplab_forward.1} parent=11 // pred_region
          %s415 = ssub.s32 16, 16
          %416 = vsyncadd [#allocation12], %s415
          %s418 = sshll.u32 [#allocation11], 4
          %s419 = int_to_ptr.vmem [resolvable:$true] %s418
          %421 = dma.hbm_to_vmem [thread:$0]  %s6, 16, %s419, [#allocation12]
        $region36: #{small_deeplab_forward.1} parent=11 // pred_fallthru
          _
        // Predicated region
        $region37: #{small_deeplab_forward.1} parent=11 // pred_check
          %p422 = pneg %p211
        $region38: #{small_deeplab_forward.1} parent=11 // pred_check_branch
          %424 = sbr.rel (%p422) target = $region40
        $region39: #{small_deeplab_forward.1} parent=11 // pred_region
          _
        $region40: #{small_deeplab_forward.1} parent=11 // pred_fallthru
          _
        // Predicated region
        $region41: #{small_deeplab_forward.1} parent=11 // pred_check
          %p425 = pneg %p232
        $region42: #{small_deeplab_forward.1} parent=11 // pred_check_branch
          %427 = sbr.rel (%p425) target = $region44
        $region43: #{small_deeplab_forward.1} parent=11 // pred_region
          _
        $region44: #{small_deeplab_forward.1} parent=11 // pred_fallthru
          _
        // Predicated region
        $region45: #{small_deeplab_forward.1} parent=11 // pred_check
          %p428 = pneg %p253
        $region46: #{small_deeplab_forward.1} parent=11 // pred_check_branch
          %430 = sbr.rel (%p428) target = $region48
        $region47: #{small_deeplab_forward.1} parent=11 // pred_region
          %s432 = ssub.s32 128, 128
          %433 = vsyncadd [#allocation12], %s432
          %s435 = sshll.u32 [#allocation13], 4
          %s436 = int_to_ptr.vmem [resolvable:$true] %s435
          %438 = dma.hbm_to_vmem [thread:$0]  %s9, 128, %s436, [#allocation12]
        $region48: #{small_deeplab_forward.1} parent=11 // pred_fallthru
          _
      $region12: #{small_deeplab_forward.1} parent=5 // pred_fallthru
        _
      %p439 = scmp.lt.s32.totalorder %s26, 4
      // Predicated region
      $region49: #{small_deeplab_forward.1} parent=5 // pred_check
        %p440 = pneg %p439
      $region50: #{small_deeplab_forward.1} parent=5 // pred_check_branch
        %442 = sbr.rel (%p440) target = $region52
      $region51: #{small_deeplab_forward.1} parent=5 // pred_region
        // Predicated region
        $region53: #{small_deeplab_forward.1} parent=51 // pred_check
          %p443 = pneg %p58
        $region54: #{small_deeplab_forward.1} parent=51 // pred_check_branch
          %445 = sbr.rel (%p443) target = $region56
        $region55: #{small_deeplab_forward.1} parent=51 // pred_region
          %p446 = scmp.lt.s32.totalorder %s33, 1
          %s447 = scalar_select %p446, %s33, 1
          %s448 = smul.addr %s447, 2
          %s449 = smul.addr %s448, 4
          %s450 = scalar_lea.vmem %s0, %s449
        $region56: #{small_deeplab_forward.1} parent=51 // pred_fallthru
          _
        // Predicated region
        $region57: #{small_deeplab_forward.1} parent=51 // pred_check
          %p451 = pneg %p273
        $region58: #{small_deeplab_forward.1} parent=51 // pred_check_branch
          %453 = sbr.rel (%p451) target = $region60
        $region59: #{small_deeplab_forward.1} parent=51 // pred_region
          %s454 = smul.u32 16, %s34
          %p455 = scmp.lt.s32.totalorder %s454, 31
          %s456 = scalar_select %p455, %s454, 31
          %s457 = smul.addr %s456, 8
          %s458 = scalar_lea.vmem %s10, %s457
          %s459 = smul.u32 16, %s34
        $region60: #{small_deeplab_forward.1} parent=51 // pred_fallthru
          _
      $region52: #{small_deeplab_forward.1} parent=5 // pred_fallthru
        _
      %p460 = scmp.le.s32.totalorder 1, %s26
      %p461 = scmp.lt.s32.totalorder %s26, 5
      %p462 = pnand %p460, %p461
      %p463 = pneg %p462
      // Predicated region
      $region61: #{small_deeplab_forward.1} parent=5 // pred_check
        _
      $region62: #{small_deeplab_forward.1} parent=5 // pred_check_branch
        %465 = sbr.rel (%p462) target = $region64
      $region63: #{small_deeplab_forward.1} parent=5 // pred_region
        %s466 = ssub.s32 %s26, 1
        // Predicated region
        $region65: #{small_deeplab_forward.1} parent=63 // pred_check
          %p467 = pneg %p85
        $region66: #{small_deeplab_forward.1} parent=63 // pred_check_branch
          %469 = sbr.rel (%p467) target = $region68
        $region67: #{small_deeplab_forward.1} parent=63 // pred_region
          %470 = dma.done [#allocation3], 192
        $region68: #{small_deeplab_forward.1} parent=63 // pred_fallthru
          _
        // Predicated region
        $region69: #{small_deeplab_forward.1} parent=63 // pred_check
          %p471 = pneg %p106
        $region70: #{small_deeplab_forward.1} parent=63 // pred_check_branch
          %473 = sbr.rel (%p471) target = $region72
        $region71: #{small_deeplab_forward.1} parent=63 // pred_region
          %474 = dma.done [#allocation6], 1536
        $region72: #{small_deeplab_forward.1} parent=63 // pred_fallthru
          _
        // Predicated region
        $region73: #{small_deeplab_forward.1} parent=63 // pred_check
          %p475 = pneg %p127
        $region74: #{small_deeplab_forward.1} parent=63 // pred_check_branch
          %477 = sbr.rel (%p475) target = $region76
        $region75: #{small_deeplab_forward.1} parent=63 // pred_region
          %478 = dma.done [#allocation6], 16
        $region76: #{small_deeplab_forward.1} parent=63 // pred_fallthru
          _
        // Predicated region
        $region77: #{small_deeplab_forward.1} parent=63 // pred_check
          %p479 = pneg %p148
        $region78: #{small_deeplab_forward.1} parent=63 // pred_check_branch
          %481 = sbr.rel (%p479) target = $region80
        $region79: #{small_deeplab_forward.1} parent=63 // pred_region
          %482 = dma.done [#allocation9], 96
        $region80: #{small_deeplab_forward.1} parent=63 // pred_fallthru
          _
        // Predicated region
        $region81: #{small_deeplab_forward.1} parent=63 // pred_check
          %p483 = pneg %p169
        $region82: #{small_deeplab_forward.1} parent=63 // pred_check_branch
          %485 = sbr.rel (%p483) target = $region84
        $region83: #{small_deeplab_forward.1} parent=63 // pred_region
          %486 = dma.done [#allocation9], 1536
        $region84: #{small_deeplab_forward.1} parent=63 // pred_fallthru
          _
        // Predicated region
        $region85: #{small_deeplab_forward.1} parent=63 // pred_check
          %p487 = pneg %p190
        $region86: #{small_deeplab_forward.1} parent=63 // pred_check_branch
          %489 = sbr.rel (%p487) target = $region88
        $region87: #{small_deeplab_forward.1} parent=63 // pred_region
          %490 = dma.done [#allocation12], 16
        $region88: #{small_deeplab_forward.1} parent=63 // pred_fallthru
          _
        // Predicated region
        $region89: #{small_deeplab_forward.1} parent=63 // pred_check
          %p491 = pneg %p253
        $region90: #{small_deeplab_forward.1} parent=63 // pred_check_branch
          %493 = sbr.rel (%p491) target = $region92
        $region91: #{small_deeplab_forward.1} parent=63 // pred_region
          %494 = dma.done [#allocation12], 128
        $region92: #{small_deeplab_forward.1} parent=63 // pred_fallthru
          _
        %p495 = scmp.lt.s32.totalorder %s35, 1
        %s496 = scalar_select %p495, %s35, 1
        %s497 = smul.addr %s496, 2
        %s498 = smul.addr %s497, 4
        %s499 = scalar_lea.vmem %s0, %s498
        %p500 = pneg %p64
        %p501 = pneg %p61
        %p502 = pneg %p85
        %p503 = pneg %p82
        %p504 = pneg %p106
        %p505 = pneg %p103
        %p506 = pneg %p127
        %p507 = pneg %p124
        %p508 = pneg %p148
        %p509 = pneg %p145
        %p510 = pneg %p169
        %p511 = pneg %p166
        %p512 = pneg %p190
        %p513 = pneg %p187
        %p514 = pneg %p211
        %p515 = pneg %p208
        %p516 = pneg %p232
        %p517 = pneg %p229
        %p518 = pneg %p253
        %p519 = pneg %p250
        %s520 = smul.u32 16, %s36
        %p521 = scmp.lt.s32.totalorder %s520, 31
        %s522 = scalar_select %p521, %s520, 31
        %s523 = smul.addr %s522, 8
        %s524 = scalar_lea.vmem %s10, %s523
        %p525 = pneg %p279
        %p526 = pneg %p276
        %p527 = pneg %p307
        %p528 = pneg %p304
        %s529 = sand.u32 %s294, 1
        %s530 = scalar_lea.sflag [#allocation4], %s529
        %s531 = sand.u32 %s294, 1
        %s532 = smul.addr %s531, 768
        %s533 = scalar_lea.vmem [#allocation14], %s532
        %p534 = pneg %p333
        %p535 = pneg %p330
        %p536 = scmp.lt.s32.totalorder %s35, 1
        %s537 = scalar_select %p536, %s35, 1
        %s538 = smul.addr %s537, 4
        %s539 = scalar_lea.vmem %s12, %s538
        %p540 = scmp.lt.s32.totalorder %s35, 1
        %s541 = scalar_select %p540, %s35, 1
        %s542 = smul.addr %s541, 2
        %s543 = smul.addr %s542, 4
        %s544 = scalar_lea.vmem %s0, %s543
        %s545 = smul.u32 16, %s36
        %p546 = scmp.lt.s32.totalorder %s545, 31
        %s547 = scalar_select %p546, %s545, 31
        %s548 = smul.addr %s547, 8
        %s549 = scalar_lea.vmem %s10, %s548
        %s550 = smul.u32 16, %s36
        %s551 = smul.u32 16, %s36
        %p552 = scmp.lt.s32.totalorder %s35, 1
        %s553 = scalar_select %p552, %s35, 1
        %s554 = smul.addr %s553, 4
        %s555 = scalar_lea.vmem %s12, %s554
        %v557 = vld [vmem:[%s544] sm:$0xf]
        %v558 = vld [vmem:[%s544 + $0x4] sm:$0xf]
        %v559 = vld [vmem:[#allocation2] sm:$0xf]
        %v562 = vunpack.c.l.b16 %v557
        %v563 = vunpack.c.l.b16 %v558
        %v564 = vpack.c.b16 %v563, %v562
        %vm566 = vcmask 130048
        %v568 = vsel %vm566, %v559, 0
        %570 = vmatprep.subr.bf16.mxu0 0
        %571 = vmatpush1.bf16.msra.mxu0 %v564
        %572 = vmatprep.subr.bf16.mxu0 0
        %573 = vmatpush1.bf16.msra.mxu0 0
        %574 = vmatprep.subr.bf16.mxu0 0
        %575 = vmatpush1.bf16.msra.mxu0 0
        %576 = vmatprep.subr.bf16.mxu0 0
        %577 = vmatpush1.bf16.msra.mxu0 0
        %578 = vmatprep.subr.bf16.mxu0 0
        %579 = vmatpush1.bf16.msra.mxu0 0
        %580 = vmatprep.subr.bf16.mxu0 0
        %581 = vmatpush1.bf16.msra.mxu0 0
        %582 = vmatprep.subr.bf16.mxu0 0
        %583 = vmatpush1.bf16.msra.mxu0 0
        %584 = vmatprep.subr.bf16.mxu0 0
        %585 = vmatpush1.bf16.msra.mxu0 0
        %586 = vmatprep.subr.bf16.mxu0 0
        %587 = vmatpush1.bf16.msra.mxu0 0
        %588 = vmatprep.subr.bf16.mxu0 0
        %589 = vmatpush1.bf16.msra.mxu0 0
        %590 = vmatprep.subr.bf16.mxu0 0
        %591 = vmatpush1.bf16.msra.mxu0 0
        %592 = vmatprep.subr.bf16.mxu0 0
        %593 = vmatpush1.bf16.msra.mxu0 0
        %594 = vmatprep.subr.bf16.mxu0 0
        %595 = vmatpush1.bf16.msra.mxu0 0
        %596 = vmatprep.subr.bf16.mxu0 0
        %597 = vmatpush1.bf16.msra.mxu0 0
        %598 = vmatprep.subr.bf16.mxu0 0
        %599 = vmatpush1.bf16.msra.mxu0 0
        %600 = vmatprep.subr.bf16.mxu0 0
        %601 = vmatpush1.bf16.msra.mxu0 0
        %602 = vmatprep.mubr.bf16.mxu0 0
        %603 = vmatmul.mubr.bf16.gmra.mrb[0].mxu0 %v568
        %v604 = vpop.f32.mrb[0].mxu0
        %v605 = vadd.f32 0.0, %v604
        %v606 = vpop.f32.mrb[0].mxu0
        %v607 = vpop.f32.mrb[0].mxu0
        %v608 = vpop.f32.mrb[0].mxu0
        %609 = vdwg.mxu0
        %v610 = vpack.c.bf16 %v605, %v605
        %v611 = vld [vmem:[#allocation5] sm:$0xf]
        %v612 = vld [vmem:[#allocation5 + $0x4] sm:$0xf]
        %v613 = vld [vmem:[#allocation5 + $0x8] sm:$0xf]
        %v614 = vld [vmem:[#allocation5 + $0xc] sm:$0xf]
        %v615 = vld [vmem:[#allocation5 + $0x10] sm:$0xf]
        %v616 = vld [vmem:[#allocation5 + $0x14] sm:$0xf]
        %v617 = vld [vmem:[#allocation5 + $0x18] sm:$0xf]
        %v618 = vld [vmem:[#allocation5 + $0x1c] sm:$0xf]
        %s619 = scalar_lea.vmem [#allocation2], 4
        %v620 = vld [vmem:[%s619] sm:$0xf]
        %v622 = vsel %vm566, %v620, 0
        %624 = vmatprep.subr.bf16.mxu0 0
        %625 = vmatpush1.bf16.msra.mxu0 %v564
        %626 = vmatprep.subr.bf16.mxu0 0
        %627 = vmatpush1.bf16.msra.mxu0 0
        %628 = vmatprep.subr.bf16.mxu0 0
        %629 = vmatpush1.bf16.msra.mxu0 0
        %630 = vmatprep.subr.bf16.mxu0 0
        %631 = vmatpush1.bf16.msra.mxu0 0
        %632 = vmatprep.subr.bf16.mxu0 0
        %633 = vmatpush1.bf16.msra.mxu0 0
        %634 = vmatprep.subr.bf16.mxu0 0
        %635 = vmatpush1.bf16.msra.mxu0 0
        %636 = vmatprep.subr.bf16.mxu0 0
        %637 = vmatpush1.bf16.msra.mxu0 0
        %638 = vmatprep.subr.bf16.mxu0 0
        %639 = vmatpush1.bf16.msra.mxu0 0
        %640 = vmatprep.subr.bf16.mxu0 0
        %641 = vmatpush1.bf16.msra.mxu0 0
        %642 = vmatprep.subr.bf16.mxu0 0
        %643 = vmatpush1.bf16.msra.mxu0 0
        %644 = vmatprep.subr.bf16.mxu0 0
        %645 = vmatpush1.bf16.msra.mxu0 0
        %646 = vmatprep.subr.bf16.mxu0 0
        %647 = vmatpush1.bf16.msra.mxu0 0
        %648 = vmatprep.subr.bf16.mxu0 0
        %649 = vmatpush1.bf16.msra.mxu0 0
        %650 = vmatprep.subr.bf16.mxu0 0
        %651 = vmatpush1.bf16.msra.mxu0 0
        %652 = vmatprep.subr.bf16.mxu0 0
        %653 = vmatpush1.bf16.msra.mxu0 0
        %654 = vmatprep.subr.bf16.mxu0 0
        %655 = vmatpush1.bf16.msra.mxu0 0
        %656 = vmatprep.mubr.bf16.mxu0 0
        %657 = vmatmul.mubr.bf16.gmra.mrb[0].mxu0 %v622
        %v658 = vpop.f32.mrb[0].mxu0
        %v659 = vadd.f32 0.0, %v658
        %v660 = vpop.f32.mrb[0].mxu0
        %v661 = vpop.f32.mrb[0].mxu0
        %v662 = vpop.f32.mrb[0].mxu0
        %663 = vdwg.mxu0
        %v664 = vpack.c.bf16 %v659, %v659
        %s665 = scalar_lea.vmem [#allocation5], 32
        %v666 = vld [vmem:[%s665] sm:$0xf]
        %v667 = vld [vmem:[%s665 + $0x4] sm:$0xf]
        %v668 = vld [vmem:[%s665 + $0x8] sm:$0xf]
        %v669 = vld [vmem:[%s665 + $0xc] sm:$0xf]
        %v670 = vld [vmem:[%s665 + $0x10] sm:$0xf]
        %v671 = vld [vmem:[%s665 + $0x14] sm:$0xf]
        %v672 = vld [vmem:[%s665 + $0x18] sm:$0xf]
        %v673 = vld [vmem:[%s665 + $0x1c] sm:$0xf]
        %v682 = vunpack.c.l.b16 %v666
        %v683 = vunpack.c.l.b16 %v667
        %v684 = vunpack.c.l.b16 %v668
        %v685 = vunpack.c.l.b16 %v669
        %v686 = vunpack.c.l.b16 %v670
        %v687 = vunpack.c.l.b16 %v671
        %v688 = vunpack.c.l.b16 %v672
        %v689 = vunpack.c.l.b16 %v673
        %v690 = vpack.c.b16 %v683, %v682
        %v691 = vpack.c.b16 %v685, %v684
        %v692 = vpack.c.b16 %v687, %v686
        %v693 = vpack.c.b16 %v689, %v688
        %vm698 = vcmask 523264
        %v700 = vsel %vm698, %v664, 0
        %702 = vmatprep.subr.bf16.mxu0 0
        %703 = vmatpush1.bf16.msra.mxu0 %v690
        %704 = vmatprep.subr.bf16.mxu0 0
        %705 = vmatpush1.bf16.msra.mxu0 %v691
        %706 = vmatprep.subr.bf16.mxu0 0
        %707 = vmatpush1.bf16.msra.mxu0 %v692
        %708 = vmatprep.subr.bf16.mxu0 0
        %709 = vmatpush1.bf16.msra.mxu0 %v693
        %710 = vmatprep.subr.bf16.mxu0 0
        %711 = vmatpush1.bf16.msra.mxu0 0
        %712 = vmatprep.subr.bf16.mxu0 0
        %713 = vmatpush1.bf16.msra.mxu0 0
        %714 = vmatprep.subr.bf16.mxu0 0
        %715 = vmatpush1.bf16.msra.mxu0 0
        %716 = vmatprep.subr.bf16.mxu0 0
        %717 = vmatpush1.bf16.msra.mxu0 0
        %718 = vmatprep.subr.bf16.mxu0 0
        %719 = vmatpush1.bf16.msra.mxu0 0
        %720 = vmatprep.subr.bf16.mxu0 0
        %721 = vmatpush1.bf16.msra.mxu0 0
        %722 = vmatprep.subr.bf16.mxu0 0
        %723 = vmatpush1.bf16.msra.mxu0 0
        %724 = vmatprep.subr.bf16.mxu0 0
        %725 = vmatpush1.bf16.msra.mxu0 0
        %726 = vmatprep.subr.bf16.mxu0 0
        %727 = vmatpush1.bf16.msra.mxu0 0
        %728 = vmatprep.subr.bf16.mxu0 0
        %729 = vmatpush1.bf16.msra.mxu0 0
        %730 = vmatprep.subr.bf16.mxu0 0
        %731 = vmatpush1.bf16.msra.mxu0 0
        %732 = vmatprep.subr.bf16.mxu0 0
        %733 = vmatpush1.bf16.msra.mxu0 0
        %734 = vmatprep.mubr.bf16.mxu0 0
        %735 = vmatmul.mubr.bf16.gmra.mrb[0].mxu0 %v700
        %v736 = vpop.f32.mrb[0].mxu0
        %v737 = vadd.f32 0.0, %v736
        %v738 = vpop.f32.mrb[0].mxu0
        %v739 = vpop.f32.mrb[0].mxu0
        %v740 = vpop.f32.mrb[0].mxu0
        %741 = vdwg.mxu0
        %v750 = vunpack.c.l.b16 %v611
        %v751 = vunpack.c.l.b16 %v612
        %v752 = vunpack.c.l.b16 %v613
        %v753 = vunpack.c.l.b16 %v614
        %v754 = vunpack.c.l.b16 %v615
        %v755 = vunpack.c.l.b16 %v616
        %v756 = vunpack.c.l.b16 %v617
        %v757 = vunpack.c.l.b16 %v618
        %v758 = vpack.c.b16 %v751, %v750
        %v759 = vpack.c.b16 %v753, %v752
        %v760 = vpack.c.b16 %v755, %v754
        %v761 = vpack.c.b16 %v757, %v756
        %v767 = vsel %vm698, %v610, 0
        %769 = vmatprep.subr.bf16.mxu0 0
        %770 = vmatpush1.bf16.msra.mxu0 %v758
        %771 = vmatprep.subr.bf16.mxu0 0
        %772 = vmatpush1.bf16.msra.mxu0 %v759
        %773 = vmatprep.subr.bf16.mxu0 0
        %774 = vmatpush1.bf16.msra.mxu0 %v760
        %775 = vmatprep.subr.bf16.mxu0 0
        %776 = vmatpush1.bf16.msra.mxu0 %v761
        %777 = vmatprep.subr.bf16.mxu0 0
        %778 = vmatpush1.bf16.msra.mxu0 0
        %779 = vmatprep.subr.bf16.mxu0 0
        %780 = vmatpush1.bf16.msra.mxu0 0
        %781 = vmatprep.subr.bf16.mxu0 0
        %782 = vmatpush1.bf16.msra.mxu0 0
        %783 = vmatprep.subr.bf16.mxu0 0
        %784 = vmatpush1.bf16.msra.mxu0 0
        %785 = vmatprep.subr.bf16.mxu0 0
        %786 = vmatpush1.bf16.msra.mxu0 0
        %787 = vmatprep.subr.bf16.mxu0 0
        %788 = vmatpush1.bf16.msra.mxu0 0
        %789 = vmatprep.subr.bf16.mxu0 0
        %790 = vmatpush1.bf16.msra.mxu0 0
        %791 = vmatprep.subr.bf16.mxu0 0
        %792 = vmatpush1.bf16.msra.mxu0 0
        %793 = vmatprep.subr.bf16.mxu0 0
        %794 = vmatpush1.bf16.msra.mxu0 0
        %795 = vmatprep.subr.bf16.mxu0 0
        %796 = vmatpush1.bf16.msra.mxu0 0
        %797 = vmatprep.subr.bf16.mxu0 0
        %798 = vmatpush1.bf16.msra.mxu0 0
        %799 = vmatprep.subr.bf16.mxu0 0
        %800 = vmatpush1.bf16.msra.mxu0 0
        %801 = vmatprep.mubr.bf16.mxu0 0
        %802 = vmatmul.mubr.bf16.gmra.mrb[0].mxu0 %v767
        %v803 = vpop.f32.mrb[0].mxu0
        %v804 = vadd.f32 %v737, %v803
        %v805 = vpop.f32.mrb[0].mxu0
        %v806 = vpop.f32.mrb[0].mxu0
        %v807 = vpop.f32.mrb[0].mxu0
        %808 = vdwg.mxu0
        %s809 = scalar_lea.vmem [#allocation2], 8
        %v810 = vld [vmem:[%s809] sm:$0xf]
        %v812 = vsel %vm566, %v810, 0
        %814 = vmatprep.subr.bf16.mxu0 0
        %815 = vmatpush1.bf16.msra.mxu0 %v564
        %816 = vmatprep.subr.bf16.mxu0 0
        %817 = vmatpush1.bf16.msra.mxu0 0
        %818 = vmatprep.subr.bf16.mxu0 0
        %819 = vmatpush1.bf16.msra.mxu0 0
        %820 = vmatprep.subr.bf16.mxu0 0
        %821 = vmatpush1.bf16.msra.mxu0 0
        %822 = vmatprep.subr.bf16.mxu0 0
        %823 = vmatpush1.bf16.msra.mxu0 0
        %824 = vmatprep.subr.bf16.mxu0 0
        %825 = vmatpush1.bf16.msra.mxu0 0
        %826 = vmatprep.subr.bf16.mxu0 0
        %827 = vmatpush1.bf16.msra.mxu0 0
        %828 = vmatprep.subr.bf16.mxu0 0
        %829 = vmatpush1.bf16.msra.mxu0 0
        %830 = vmatprep.subr.bf16.mxu0 0
        %831 = vmatpush1.bf16.msra.mxu0 0
        %832 = vmatprep.subr.bf16.mxu0 0
        %833 = vmatpush1.bf16.msra.mxu0 0
        %834 = vmatprep.subr.bf16.mxu0 0
        %835 = vmatpush1.bf16.msra.mxu0 0
        %836 = vmatprep.subr.bf16.mxu0 0
        %837 = vmatpush1.bf16.msra.mxu0 0
        %838 = vmatprep.subr.bf16.mxu0 0
        %839 = vmatpush1.bf16.msra.mxu0 0
        %840 = vmatprep.subr.bf16.mxu0 0
        %841 = vmatpush1.bf16.msra.mxu0 0
        %842 = vmatprep.subr.bf16.mxu0 0
        %843 = vmatpush1.bf16.msra.mxu0 0
        %844 = vmatprep.subr.bf16.mxu0 0
        %845 = vmatpush1.bf16.msra.mxu0 0
        %846 = vmatprep.mubr.bf16.mxu0 0
        %847 = vmatmul.mubr.bf16.gmra.mrb[0].mxu0 %v812
        %v848 = vpop.f32.mrb[0].mxu0
        %v849 = vadd.f32 0.0, %v848
        %v850 = vpop.f32.mrb[0].mxu0
        %v851 = vpop.f32.mrb[0].mxu0
        %v852 = vpop.f32.mrb[0].mxu0
        %853 = vdwg.mxu0
        %v854 = vpack.c.bf16 %v849, %v849
        %s855 = scalar_lea.vmem [#allocation5], 64
        %v856 = vld [vmem:[%s855] sm:$0xf]
        %v857 = vld [vmem:[%s855 + $0x4] sm:$0xf]
        %v858 = vld [vmem:[%s855 + $0x8] sm:$0xf]
        %v859 = vld [vmem:[%s855 + $0xc] sm:$0xf]
        %v860 = vld [vmem:[%s855 + $0x10] sm:$0xf]
        %v861 = vld [vmem:[%s855 + $0x14] sm:$0xf]
        %v862 = vld [vmem:[%s855 + $0x18] sm:$0xf]
        %v863 = vld [vmem:[%s855 + $0x1c] sm:$0xf]
        %v872 = vunpack.c.l.b16 %v856
        %v873 = vunpack.c.l.b16 %v857
        %v874 = vunpack.c.l.b16 %v858
        %v875 = vunpack.c.l.b16 %v859
        %v876 = vunpack.c.l.b16 %v860
        %v877 = vunpack.c.l.b16 %v861
        %v878 = vunpack.c.l.b16 %v862
        %v879 = vunpack.c.l.b16 %v863
        %v880 = vpack.c.b16 %v873, %v872
        %v881 = vpack.c.b16 %v875, %v874
        %v882 = vpack.c.b16 %v877, %v876
        %v883 = vpack.c.b16 %v879, %v878
        %v889 = vsel %vm698, %v854, 0
        %891 = vmatprep.subr.bf16.mxu0 0
        %892 = vmatpush1.bf16.msra.mxu0 %v880
        %893 = vmatprep.subr.bf16.mxu0 0
        %894 = vmatpush1.bf16.msra.mxu0 %v881
        %895 = vmatprep.subr.bf16.mxu0 0
        %896 = vmatpush1.bf16.msra.mxu0 %v882
        %897 = vmatprep.subr.bf16.mxu0 0
        %898 = vmatpush1.bf16.msra.mxu0 %v883
        %899 = vmatprep.subr.bf16.mxu0 0
        %900 = vmatpush1.bf16.msra.mxu0 0
        %901 = vmatprep.subr.bf16.mxu0 0
        %902 = vmatpush1.bf16.msra.mxu0 0
        %903 = vmatprep.subr.bf16.mxu0 0
        %904 = vmatpush1.bf16.msra.mxu0 0
        %905 = vmatprep.subr.bf16.mxu0 0
        %906 = vmatpush1.bf16.msra.mxu0 0
        %907 = vmatprep.subr.bf16.mxu0 0
        %908 = vmatpush1.bf16.msra.mxu0 0
        %909 = vmatprep.subr.bf16.mxu0 0
        %910 = vmatpush1.bf16.msra.mxu0 0
        %911 = vmatprep.subr.bf16.mxu0 0
        %912 = vmatpush1.bf16.msra.mxu0 0
        %913 = vmatprep.subr.bf16.mxu0 0
        %914 = vmatpush1.bf16.msra.mxu0 0
        %915 = vmatprep.subr.bf16.mxu0 0
        %916 = vmatpush1.bf16.msra.mxu0 0
        %917 = vmatprep.subr.bf16.mxu0 0
        %918 = vmatpush1.bf16.msra.mxu0 0
        %919 = vmatprep.subr.bf16.mxu0 0
        %920 = vmatpush1.bf16.msra.mxu0 0
        %921 = vmatprep.subr.bf16.mxu0 0
        %922 = vmatpush1.bf16.msra.mxu0 0
        %923 = vmatprep.mubr.bf16.mxu0 0
        %924 = vmatmul.mubr.bf16.gmra.mrb[0].mxu0 %v889
        %v925 = vpop.f32.mrb[0].mxu0
        %v926 = vadd.f32 0.0, %v925
        %v927 = vpop.f32.mrb[0].mxu0
        %v928 = vpop.f32.mrb[0].mxu0
        %v929 = vpop.f32.mrb[0].mxu0
        %930 = vdwg.mxu0
        %v931 = vadd.f32 %v804, %v926
        %v932 = vld [vmem:[#allocation7] sm:$0x1]
        %v934 = vlaneseq
        %v935 = vshrl.u32 %v934, 7
        %v936 = vsub.s32 0, %v935
        %v937 = vrot.slane %v932, %v936
        %v939 = vadd.f32 %v931, %v937
        %v940 = vmax.f32 %v939, 0.0
        %v941 = vpack.c.bf16 %v940, %v940
        %v942 = vld [vmem:[#allocation8] sm:$0x3]
        %vm943 = vcmask 64512
        %v945 = vsel %vm943, %v942, 0
        %vm947 = vcmask 1043456
        %v949 = vsel %vm947, %v941, 0
        %951 = vmatprep.subr.bf16.mxu0 0
        %952 = vmatpush1.bf16.msra.mxu0 %v949
        %953 = vmatprep.subr.bf16.mxu0 0
        %954 = vmatpush1.bf16.msra.mxu0 0
        %955 = vmatprep.subr.bf16.mxu0 0
        %956 = vmatpush1.bf16.msra.mxu0 0
        %957 = vmatprep.subr.bf16.mxu0 0
        %958 = vmatpush1.bf16.msra.mxu0 0
        %959 = vmatprep.subr.bf16.mxu0 0
        %960 = vmatpush1.bf16.msra.mxu0 0
        %961 = vmatprep.subr.bf16.mxu0 0
        %962 = vmatpush1.bf16.msra.mxu0 0
        %963 = vmatprep.subr.bf16.mxu0 0
        %964 = vmatpush1.bf16.msra.mxu0 0
        %965 = vmatprep.subr.bf16.mxu0 0
        %966 = vmatpush1.bf16.msra.mxu0 0
        %967 = vmatprep.subr.bf16.mxu0 0
        %968 = vmatpush1.bf16.msra.mxu0 0
        %969 = vmatprep.subr.bf16.mxu0 0
        %970 = vmatpush1.bf16.msra.mxu0 0
        %971 = vmatprep.subr.bf16.mxu0 0
        %972 = vmatpush1.bf16.msra.mxu0 0
        %973 = vmatprep.subr.bf16.mxu0 0
        %974 = vmatpush1.bf16.msra.mxu0 0
        %975 = vmatprep.subr.bf16.mxu0 0
        %976 = vmatpush1.bf16.msra.mxu0 0
        %977 = vmatprep.subr.bf16.mxu0 0
        %978 = vmatpush1.bf16.msra.mxu0 0
        %979 = vmatprep.subr.bf16.mxu0 0
        %980 = vmatpush1.bf16.msra.mxu0 0
        %981 = vmatprep.subr.bf16.mxu0 0
        %982 = vmatpush1.bf16.msra.mxu0 0
        %983 = vmatprep.mubr.bf16.mxu0 0
        %984 = vmatmul.mubr.bf16.gmra.mrb[0].mxu0 %v945
        %v985 = vpop.f32.mrb[0].mxu0
        %v986 = vadd.f32 0.0, %v985
        %v987 = vpop.f32.mrb[0].mxu0
        %v988 = vpop.f32.mrb[0].mxu0
        %v989 = vpop.f32.mrb[0].mxu0
        %990 = vdwg.mxu0
        %v991 = vpack.c.bf16 %v986, %v986
        %v992 = vld [vmem:[#allocation10] sm:$0xf]
        %v993 = vld [vmem:[#allocation10 + $0x4] sm:$0xf]
        %v994 = vld [vmem:[#allocation10 + $0x8] sm:$0xf]
        %v995 = vld [vmem:[#allocation10 + $0xc] sm:$0xf]
        %v996 = vld [vmem:[#allocation10 + $0x10] sm:$0xf]
        %v997 = vld [vmem:[#allocation10 + $0x14] sm:$0xf]
        %v998 = vld [vmem:[#allocation10 + $0x18] sm:$0xf]
        %v999 = vld [vmem:[#allocation10 + $0x1c] sm:$0xf]
        %s1000 = scalar_lea.vmem [#allocation8], 2
        %v1001 = vld [vmem:[%s1000] sm:$0x3]
        %v1003 = vsel %vm943, %v1001, 0
        %1005 = vmatprep.subr.bf16.mxu0 0
        %1006 = vmatpush1.bf16.msra.mxu0 %v949
        %1007 = vmatprep.subr.bf16.mxu0 0
        %1008 = vmatpush1.bf16.msra.mxu0 0
        %1009 = vmatprep.subr.bf16.mxu0 0
        %1010 = vmatpush1.bf16.msra.mxu0 0
        %1011 = vmatprep.subr.bf16.mxu0 0
        %1012 = vmatpush1.bf16.msra.mxu0 0
        %1013 = vmatprep.subr.bf16.mxu0 0
        %1014 = vmatpush1.bf16.msra.mxu0 0
        %1015 = vmatprep.subr.bf16.mxu0 0
        %1016 = vmatpush1.bf16.msra.mxu0 0
        %1017 = vmatprep.subr.bf16.mxu0 0
        %1018 = vmatpush1.bf16.msra.mxu0 0
        %1019 = vmatprep.subr.bf16.mxu0 0
        %1020 = vmatpush1.bf16.msra.mxu0 0
        %1021 = vmatprep.subr.bf16.mxu0 0
        %1022 = vmatpush1.bf16.msra.mxu0 0
        %1023 = vmatprep.subr.bf16.mxu0 0
        %1024 = vmatpush1.bf16.msra.mxu0 0
        %1025 = vmatprep.subr.bf16.mxu0 0
        %1026 = vmatpush1.bf16.msra.mxu0 0
        %1027 = vmatprep.subr.bf16.mxu0 0
        %1028 = vmatpush1.bf16.msra.mxu0 0
        %1029 = vmatprep.subr.bf16.mxu0 0
        %1030 = vmatpush1.bf16.msra.mxu0 0
        %1031 = vmatprep.subr.bf16.mxu0 0
        %1032 = vmatpush1.bf16.msra.mxu0 0
        %1033 = vmatprep.subr.bf16.mxu0 0
        %1034 = vmatpush1.bf16.msra.mxu0 0
        %1035 = vmatprep.subr.bf16.mxu0 0
        %1036 = vmatpush1.bf16.msra.mxu0 0
        %1037 = vmatprep.mubr.bf16.mxu0 0
        %1038 = vmatmul.mubr.bf16.gmra.mrb[0].mxu0 %v1003
        %v1039 = vpop.f32.mrb[0].mxu0
        %v1040 = vadd.f32 0.0, %v1039
        %v1041 = vpop.f32.mrb[0].mxu0
        %v1042 = vpop.f32.mrb[0].mxu0
        %v1043 = vpop.f32.mrb[0].mxu0
        %1044 = vdwg.mxu0
        %v1045 = vpack.c.bf16 %v1040, %v1040
        %s1046 = scalar_lea.vmem [#allocation10], 32
        %v1047 = vld [vmem:[%s1046] sm:$0xf]
        %v1048 = vld [vmem:[%s1046 + $0x4] sm:$0xf]
        %v1049 = vld [vmem:[%s1046 + $0x8] sm:$0xf]
        %v1050 = vld [vmem:[%s1046 + $0xc] sm:$0xf]
        %v1051 = vld [vmem:[%s1046 + $0x10] sm:$0xf]
        %v1052 = vld [vmem:[%s1046 + $0x14] sm:$0xf]
        %v1053 = vld [vmem:[%s1046 + $0x18] sm:$0xf]
        %v1054 = vld [vmem:[%s1046 + $0x1c] sm:$0xf]
        %v1063 = vunpack.c.l.b16 %v1047
        %v1064 = vunpack.c.l.b16 %v1048
        %v1065 = vunpack.c.l.b16 %v1049
        %v1066 = vunpack.c.l.b16 %v1050
        %v1067 = vunpack.c.l.b16 %v1051
        %v1068 = vunpack.c.l.b16 %v1052
        %v1069 = vunpack.c.l.b16 %v1053
        %v1070 = vunpack.c.l.b16 %v1054
        %v1071 = vpack.c.b16 %v1064, %v1063
        %v1072 = vpack.c.b16 %v1066, %v1065
        %v1073 = vpack.c.b16 %v1068, %v1067
        %v1074 = vpack.c.b16 %v1070, %v1069
        %v1080 = vsel %vm698, %v1045, 0
        %1082 = vmatprep.subr.bf16.mxu0 0
        %1083 = vmatpush1.bf16.msra.mxu0 %v1071
        %1084 = vmatprep.subr.bf16.mxu0 0
        %1085 = vmatpush1.bf16.msra.mxu0 %v1072
        %1086 = vmatprep.subr.bf16.mxu0 0
        %1087 = vmatpush1.bf16.msra.mxu0 %v1073
        %1088 = vmatprep.subr.bf16.mxu0 0
        %1089 = vmatpush1.bf16.msra.mxu0 %v1074
        %1090 = vmatprep.subr.bf16.mxu0 0
        %1091 = vmatpush1.bf16.msra.mxu0 0
        %1092 = vmatprep.subr.bf16.mxu0 0
        %1093 = vmatpush1.bf16.msra.mxu0 0
        %1094 = vmatprep.subr.bf16.mxu0 0
        %1095 = vmatpush1.bf16.msra.mxu0 0
        %1096 = vmatprep.subr.bf16.mxu0 0
        %1097 = vmatpush1.bf16.msra.mxu0 0
        %1098 = vmatprep.subr.bf16.mxu0 0
        %1099 = vmatpush1.bf16.msra.mxu0 0
        %1100 = vmatprep.subr.bf16.mxu0 0
        %1101 = vmatpush1.bf16.msra.mxu0 0
        %1102 = vmatprep.subr.bf16.mxu0 0
        %1103 = vmatpush1.bf16.msra.mxu0 0
        %1104 = vmatprep.subr.bf16.mxu0 0
        %1105 = vmatpush1.bf16.msra.mxu0 0
        %1106 = vmatprep.subr.bf16.mxu0 0
        %1107 = vmatpush1.bf16.msra.mxu0 0
        %1108 = vmatprep.subr.bf16.mxu0 0
        %1109 = vmatpush1.bf16.msra.mxu0 0
        %1110 = vmatprep.subr.bf16.mxu0 0
        %1111 = vmatpush1.bf16.msra.mxu0 0
        %1112 = vmatprep.subr.bf16.mxu0 0
        %1113 = vmatpush1.bf16.msra.mxu0 0
        %1114 = vmatprep.mubr.bf16.mxu0 0
        %1115 = vmatmul.mubr.bf16.gmra.mrb[0].mxu0 %v1080
        %v1116 = vpop.f32.mrb[0].mxu0
        %v1117 = vadd.f32 0.0, %v1116
        %v1118 = vpop.f32.mrb[0].mxu0
        %v1119 = vpop.f32.mrb[0].mxu0
        %v1120 = vpop.f32.mrb[0].mxu0
        %1121 = vdwg.mxu0
        %v1130 = vunpack.c.l.b16 %v992
        %v1131 = vunpack.c.l.b16 %v993
        %v1132 = vunpack.c.l.b16 %v994
        %v1133 = vunpack.c.l.b16 %v995
        %v1134 = vunpack.c.l.b16 %v996
        %v1135 = vunpack.c.l.b16 %v997
        %v1136 = vunpack.c.l.b16 %v998
        %v1137 = vunpack.c.l.b16 %v999
        %v1138 = vpack.c.b16 %v1131, %v1130
        %v1139 = vpack.c.b16 %v1133, %v1132
        %v1140 = vpack.c.b16 %v1135, %v1134
        %v1141 = vpack.c.b16 %v1137, %v1136
        %v1147 = vsel %vm698, %v991, 0
        %1149 = vmatprep.subr.bf16.mxu0 0
        %1150 = vmatpush1.bf16.msra.mxu0 %v1138
        %1151 = vmatprep.subr.bf16.mxu0 0
        %1152 = vmatpush1.bf16.msra.mxu0 %v1139
        %1153 = vmatprep.subr.bf16.mxu0 0
        %1154 = vmatpush1.bf16.msra.mxu0 %v1140
        %1155 = vmatprep.subr.bf16.mxu0 0
        %1156 = vmatpush1.bf16.msra.mxu0 %v1141
        %1157 = vmatprep.subr.bf16.mxu0 0
        %1158 = vmatpush1.bf16.msra.mxu0 0
        %1159 = vmatprep.subr.bf16.mxu0 0
        %1160 = vmatpush1.bf16.msra.mxu0 0
        %1161 = vmatprep.subr.bf16.mxu0 0
        %1162 = vmatpush1.bf16.msra.mxu0 0
        %1163 = vmatprep.subr.bf16.mxu0 0
        %1164 = vmatpush1.bf16.msra.mxu0 0
        %1165 = vmatprep.subr.bf16.mxu0 0
        %1166 = vmatpush1.bf16.msra.mxu0 0
        %1167 = vmatprep.subr.bf16.mxu0 0
        %1168 = vmatpush1.bf16.msra.mxu0 0
        %1169 = vmatprep.subr.bf16.mxu0 0
        %1170 = vmatpush1.bf16.msra.mxu0 0
        %1171 = vmatprep.subr.bf16.mxu0 0
        %1172 = vmatpush1.bf16.msra.mxu0 0
        %1173 = vmatprep.subr.bf16.mxu0 0
        %1174 = vmatpush1.bf16.msra.mxu0 0
        %1175 = vmatprep.subr.bf16.mxu0 0
        %1176 = vmatpush1.bf16.msra.mxu0 0
        %1177 = vmatprep.subr.bf16.mxu0 0
        %1178 = vmatpush1.bf16.msra.mxu0 0
        %1179 = vmatprep.subr.bf16.mxu0 0
        %1180 = vmatpush1.bf16.msra.mxu0 0
        %1181 = vmatprep.mubr.bf16.mxu0 0
        %1182 = vmatmul.mubr.bf16.gmra.mrb[0].mxu0 %v1147
        %v1183 = vpop.f32.mrb[0].mxu0
        %v1184 = vadd.f32 %v1117, %v1183
        %v1185 = vpop.f32.mrb[0].mxu0
        %v1186 = vpop.f32.mrb[0].mxu0
        %v1187 = vpop.f32.mrb[0].mxu0
        %1188 = vdwg.mxu0
        %s1189 = scalar_lea.vmem [#allocation8], 4
        %v1190 = vld [vmem:[%s1189] sm:$0x3]
        %v1192 = vsel %vm943, %v1190, 0
        %1194 = vmatprep.subr.bf16.mxu0 0
        %1195 = vmatpush1.bf16.msra.mxu0 %v949
        %1196 = vmatprep.subr.bf16.mxu0 0
        %1197 = vmatpush1.bf16.msra.mxu0 0
        %1198 = vmatprep.subr.bf16.mxu0 0
        %1199 = vmatpush1.bf16.msra.mxu0 0
        %1200 = vmatprep.subr.bf16.mxu0 0
        %1201 = vmatpush1.bf16.msra.mxu0 0
        %1202 = vmatprep.subr.bf16.mxu0 0
        %1203 = vmatpush1.bf16.msra.mxu0 0
        %1204 = vmatprep.subr.bf16.mxu0 0
        %1205 = vmatpush1.bf16.msra.mxu0 0
        %1206 = vmatprep.subr.bf16.mxu0 0
        %1207 = vmatpush1.bf16.msra.mxu0 0
        %1208 = vmatprep.subr.bf16.mxu0 0
        %1209 = vmatpush1.bf16.msra.mxu0 0
        %1210 = vmatprep.subr.bf16.mxu0 0
        %1211 = vmatpush1.bf16.msra.mxu0 0
        %1212 = vmatprep.subr.bf16.mxu0 0
        %1213 = vmatpush1.bf16.msra.mxu0 0
        %1214 = vmatprep.subr.bf16.mxu0 0
        %1215 = vmatpush1.bf16.msra.mxu0 0
        %1216 = vmatprep.subr.bf16.mxu0 0
        %1217 = vmatpush1.bf16.msra.mxu0 0
        %1218 = vmatprep.subr.bf16.mxu0 0
        %1219 = vmatpush1.bf16.msra.mxu0 0
        %1220 = vmatprep.subr.bf16.mxu0 0
        %1221 = vmatpush1.bf16.msra.mxu0 0
        %1222 = vmatprep.subr.bf16.mxu0 0
        %1223 = vmatpush1.bf16.msra.mxu0 0
        %1224 = vmatprep.subr.bf16.mxu0 0
        %1225 = vmatpush1.bf16.msra.mxu0 0
        %1226 = vmatprep.mubr.bf16.mxu0 0
        %1227 = vmatmul.mubr.bf16.gmra.mrb[0].mxu0 %v1192
        %v1228 = vpop.f32.mrb[0].mxu0
        %v1229 = vadd.f32 0.0, %v1228
        %v1230 = vpop.f32.mrb[0].mxu0
        %v1231 = vpop.f32.mrb[0].mxu0
        %v1232 = vpop.f32.mrb[0].mxu0
        %1233 = vdwg.mxu0
        %v1234 = vpack.c.bf16 %v1229, %v1229
        %s1235 = scalar_lea.vmem [#allocation10], 64
        %v1236 = vld [vmem:[%s1235] sm:$0xf]
        %v1237 = vld [vmem:[%s1235 + $0x4] sm:$0xf]
        %v1238 = vld [vmem:[%s1235 + $0x8] sm:$0xf]
        %v1239 = vld [vmem:[%s1235 + $0xc] sm:$0xf]
        %v1240 = vld [vmem:[%s1235 + $0x10] sm:$0xf]
        %v1241 = vld [vmem:[%s1235 + $0x14] sm:$0xf]
        %v1242 = vld [vmem:[%s1235 + $0x18] sm:$0xf]
        %v1243 = vld [vmem:[%s1235 + $0x1c] sm:$0xf]
        %v1252 = vunpack.c.l.b16 %v1236
        %v1253 = vunpack.c.l.b16 %v1237
        %v1254 = vunpack.c.l.b16 %v1238
        %v1255 = vunpack.c.l.b16 %v1239
        %v1256 = vunpack.c.l.b16 %v1240
        %v1257 = vunpack.c.l.b16 %v1241
        %v1258 = vunpack.c.l.b16 %v1242
        %v1259 = vunpack.c.l.b16 %v1243
        %v1260 = vpack.c.b16 %v1253, %v1252
        %v1261 = vpack.c.b16 %v1255, %v1254
        %v1262 = vpack.c.b16 %v1257, %v1256
        %v1263 = vpack.c.b16 %v1259, %v1258
        %v1269 = vsel %vm698, %v1234, 0
        %1271 = vmatprep.subr.bf16.mxu0 0
        %1272 = vmatpush1.bf16.msra.mxu0 %v1260
        %1273 = vmatprep.subr.bf16.mxu0 0
        %1274 = vmatpush1.bf16.msra.mxu0 %v1261
        %1275 = vmatprep.subr.bf16.mxu0 0
        %1276 = vmatpush1.bf16.msra.mxu0 %v1262
        %1277 = vmatprep.subr.bf16.mxu0 0
        %1278 = vmatpush1.bf16.msra.mxu0 %v1263
        %1279 = vmatprep.subr.bf16.mxu0 0
        %1280 = vmatpush1.bf16.msra.mxu0 0
        %1281 = vmatprep.subr.bf16.mxu0 0
        %1282 = vmatpush1.bf16.msra.mxu0 0
        %1283 = vmatprep.subr.bf16.mxu0 0
        %1284 = vmatpush1.bf16.msra.mxu0 0
        %1285 = vmatprep.subr.bf16.mxu0 0
        %1286 = vmatpush1.bf16.msra.mxu0 0
        %1287 = vmatprep.subr.bf16.mxu0 0
        %1288 = vmatpush1.bf16.msra.mxu0 0
        %1289 = vmatprep.subr.bf16.mxu0 0
        %1290 = vmatpush1.bf16.msra.mxu0 0
        %1291 = vmatprep.subr.bf16.mxu0 0
        %1292 = vmatpush1.bf16.msra.mxu0 0
        %1293 = vmatprep.subr.bf16.mxu0 0
        %1294 = vmatpush1.bf16.msra.mxu0 0
        %1295 = vmatprep.subr.bf16.mxu0 0
        %1296 = vmatpush1.bf16.msra.mxu0 0
        %1297 = vmatprep.subr.bf16.mxu0 0
        %1298 = vmatpush1.bf16.msra.mxu0 0
        %1299 = vmatprep.subr.bf16.mxu0 0
        %1300 = vmatpush1.bf16.msra.mxu0 0
        %1301 = vmatprep.subr.bf16.mxu0 0
        %1302 = vmatpush1.bf16.msra.mxu0 0
        %1303 = vmatprep.mubr.bf16.mxu0 0
        %1304 = vmatmul.mubr.bf16.gmra.mrb[0].mxu0 %v1269
        %v1305 = vpop.f32.mrb[0].mxu0
        %v1306 = vadd.f32 0.0, %v1305
        %v1307 = vpop.f32.mrb[0].mxu0
        %v1308 = vpop.f32.mrb[0].mxu0
        %v1309 = vpop.f32.mrb[0].mxu0
        %1310 = vdwg.mxu0
        %v1311 = vadd.f32 %v1184, %v1306
        %v1312 = vld [vmem:[#allocation11] sm:$0x1]
        %v1314 = vlaneseq
        %v1315 = vshrl.u32 %v1314, 7
        %v1316 = vsub.s32 0, %v1315
        %v1317 = vrot.slane %v1312, %v1316
        %v1319 = vadd.f32 %v1311, %v1317
        %v1320 = vmax.f32 %v1319, 0.0
        %vm1321 = vcmask 519168
        %1322 = vst.msk [vmem:[%s555] sm:$0xf] %vm1321, %v1320
        %v1323 = vld [vmem:[#allocation13] sm:$0xff]
        %v1324 = vld [vmem:[%s549] sm:$0xff]
        %v1325 = vld [vmem:[%s549 + $0x8] sm:$0xff]
        %v1326 = vld [vmem:[%s549 + $0x10] sm:$0xff]
        %v1327 = vld [vmem:[%s549 + $0x18] sm:$0xff]
        %v1328 = vld [vmem:[%s549 + $0x20] sm:$0xff]
        %v1329 = vld [vmem:[%s549 + $0x28] sm:$0xff]
        %v1330 = vld [vmem:[%s549 + $0x30] sm:$0xff]
        %v1331 = vld [vmem:[%s549 + $0x38] sm:$0xff]
        %v1332 = vld [vmem:[%s549 + $0x40] sm:$0xff]
        %v1333 = vld [vmem:[%s549 + $0x48] sm:$0xff]
        %v1334 = vld [vmem:[%s549 + $0x50] sm:$0xff]
        %v1335 = vld [vmem:[%s549 + $0x58] sm:$0xff]
        %v1336 = vld [vmem:[%s549 + $0x60] sm:$0xff]
        %v1337 = vld [vmem:[%s549 + $0x68] sm:$0xff]
        %v1338 = vld [vmem:[%s549 + $0x70] sm:$0xff]
        %v1339 = vld [vmem:[%s549 + $0x78] sm:$0xff]
        %v1340 = vld [vmem:[%s7] sm:$0xff]
        %v1341 = vld [vmem:[%s7 + $0x8] sm:$0xff]
        %v1342 = vld [vmem:[%s7 + $0x10] sm:$0xff]
        %v1343 = vld [vmem:[%s7 + $0x18] sm:$0xff]
        %v1344 = vld [vmem:[%s7 + $0x20] sm:$0xff]
        %v1345 = vld [vmem:[%s7 + $0x28] sm:$0xff]
        %v1346 = vld [vmem:[%s7 + $0x30] sm:$0xff]
        %v1347 = vld [vmem:[%s7 + $0x38] sm:$0xff]
        %v1348 = vld [vmem:[%s8] sm:$0x1]
        %v1350 = vlaneseq
        %v1351 = vshrl.u32 %v1350, 7
        %v1352 = vsub.s32 0, %v1351
        %v1353 = vrot.slane %v1348, %v1352
        %1354 = vset.pattern.permute.xlu0 0
        %1355 = vperm.xlu0 %1354, %v1353
        %v1356 = vpop.permute.xlu0 %1355
        %v1359 = vsel %vm698, %v1320, 0
        %1361 = vmatprep.subr.mxu0 0.0
        %1362 = vmatpush1.msra.mxu0 %v1340
        %1363 = vmatprep.subr.mxu0 0.0
        %1364 = vmatpush1.msra.mxu0 %v1341
        %1365 = vmatprep.subr.mxu0 0.0
        %1366 = vmatpush1.msra.mxu0 %v1342
        %1367 = vmatprep.subr.mxu0 0.0
        %1368 = vmatpush1.msra.mxu0 %v1343
        %1369 = vmatprep.subr.mxu0 0.0
        %1370 = vmatpush1.msra.mxu0 %v1344
        %1371 = vmatprep.subr.mxu0 0.0
        %1372 = vmatpush1.msra.mxu0 %v1345
        %1373 = vmatprep.subr.mxu0 0.0
        %1374 = vmatpush1.msra.mxu0 %v1346
        %1375 = vmatprep.subr.mxu0 0.0
        %1376 = vmatpush1.msra.mxu0 %v1347
        %1377 = vmatprep.subr.mxu0 0.0
        %1378 = vmatpush1.msra.mxu0 0.0
        %1379 = vmatprep.subr.mxu0 0.0
        %1380 = vmatpush1.msra.mxu0 0.0
        %1381 = vmatprep.subr.mxu0 0.0
        %1382 = vmatpush1.msra.mxu0 0.0
        %1383 = vmatprep.subr.mxu0 0.0
        %1384 = vmatpush1.msra.mxu0 0.0
        %1385 = vmatprep.subr.mxu0 0.0
        %1386 = vmatpush1.msra.mxu0 0.0
        %1387 = vmatprep.subr.mxu0 0.0
        %1388 = vmatpush1.msra.mxu0 0.0
        %1389 = vmatprep.subr.mxu0 0.0
        %1390 = vmatpush1.msra.mxu0 0.0
        %1391 = vmatprep.subr.mxu0 0.0
        %1392 = vmatpush1.msra.mxu0 0.0
        %1393 = vmatprep.subr.mxu0 0.0
        %1394 = vmatpush1.msra.mxu0 0.0
        %1395 = vmatprep.subr.mxu0 0.0
        %1396 = vmatpush1.msra.mxu0 0.0
        %1397 = vmatprep.subr.mxu0 0.0
        %1398 = vmatpush1.msra.mxu0 0.0
        %1399 = vmatprep.subr.mxu0 0.0
        %1400 = vmatpush1.msra.mxu0 0.0
        %1401 = vmatprep.subr.mxu0 0.0
        %1402 = vmatpush1.msra.mxu0 0.0
        %1403 = vmatprep.subr.mxu0 0.0
        %1404 = vmatpush1.msra.mxu0 0.0
        %1405 = vmatprep.subr.mxu0 0.0
        %1406 = vmatpush1.msra.mxu0 0.0
        %1407 = vmatprep.subr.mxu0 0.0
        %1408 = vmatpush1.msra.mxu0 0.0
        %1409 = vmatprep.subr.mxu0 0.0
        %1410 = vmatpush1.msra.mxu0 0.0
        %1411 = vmatprep.subr.mxu0 0.0
        %1412 = vmatpush1.msra.mxu0 0.0
        %1413 = vmatprep.subr.mxu0 0.0
        %1414 = vmatpush1.msra.mxu0 0.0
        %1415 = vmatprep.subr.mxu0 0.0
        %1416 = vmatpush1.msra.mxu0 0.0
        %1417 = vmatprep.subr.mxu0 0.0
        %1418 = vmatpush1.msra.mxu0 0.0
        %1419 = vmatprep.subr.mxu0 0.0
        %1420 = vmatpush1.msra.mxu0 0.0
        %1421 = vmatprep.subr.mxu0 0.0
        %1422 = vmatpush1.msra.mxu0 0.0
        %1423 = vmatprep.subr.mxu0 0.0
        %1424 = vmatpush1.msra.mxu0 0.0
        %1425 = vmatprep.mubr.f32.mxu0 0.0
        %1426 = vmatmul.mubr.f32.gmra.mrb[0].mxu0 %v1359
        %v1427 = vpop.f32.mrb[0].mxu0
        %v1428 = vadd.f32 %v1356, %v1427
        %v1429 = vpop.f32.mrb[0].mxu0
        %1430 = vdwg.mxu0
        %v1432 = vcombine.high %v1323, %v1323
        %vm1433 = vcmask 31744
        %v1435 = vsel %vm1433, %v1428, 0
        %v1437 = vsel %vm947, %v1323, 0
        %v1439 = vsel %vm947, %v1432, 0
        %1441 = vmatprep.subr.mxu0 %v1439
        %1442 = vmatpush1.msra.mxu0 %v1437
        %1443 = vmatprep.subr.mxu0 0.0
        %1444 = vmatpush1.msra.mxu0 0.0
        %1445 = vmatprep.subr.mxu0 0.0
        %1446 = vmatpush1.msra.mxu0 0.0
        %1447 = vmatprep.subr.mxu0 0.0
        %1448 = vmatpush1.msra.mxu0 0.0
        %1449 = vmatprep.subr.mxu0 0.0
        %1450 = vmatpush1.msra.mxu0 0.0
        %1451 = vmatprep.subr.mxu0 0.0
        %1452 = vmatpush1.msra.mxu0 0.0
        %1453 = vmatprep.subr.mxu0 0.0
        %1454 = vmatpush1.msra.mxu0 0.0
        %1455 = vmatprep.subr.mxu0 0.0
        %1456 = vmatpush1.msra.mxu0 0.0
        %1457 = vmatprep.subr.mxu0 0.0
        %1458 = vmatpush1.msra.mxu0 0.0
        %1459 = vmatprep.subr.mxu0 0.0
        %1460 = vmatpush1.msra.mxu0 0.0
        %1461 = vmatprep.subr.mxu0 0.0
        %1462 = vmatpush1.msra.mxu0 0.0
        %1463 = vmatprep.subr.mxu0 0.0
        %1464 = vmatpush1.msra.mxu0 0.0
        %1465 = vmatprep.subr.mxu0 0.0
        %1466 = vmatpush1.msra.mxu0 0.0
        %1467 = vmatprep.subr.mxu0 0.0
        %1468 = vmatpush1.msra.mxu0 0.0
        %1469 = vmatprep.subr.mxu0 0.0
        %1470 = vmatpush1.msra.mxu0 0.0
        %1471 = vmatprep.subr.mxu0 0.0
        %1472 = vmatpush1.msra.mxu0 0.0
        %1473 = vmatprep.subr.mxu0 0.0
        %1474 = vmatpush1.msra.mxu0 0.0
        %1475 = vmatprep.subr.mxu0 0.0
        %1476 = vmatpush1.msra.mxu0 0.0
        %1477 = vmatprep.subr.mxu0 0.0
        %1478 = vmatpush1.msra.mxu0 0.0
        %1479 = vmatprep.subr.mxu0 0.0
        %1480 = vmatpush1.msra.mxu0 0.0
        %1481 = vmatprep.subr.mxu0 0.0
        %1482 = vmatpush1.msra.mxu0 0.0
        %1483 = vmatprep.subr.mxu0 0.0
        %1484 = vmatpush1.msra.mxu0 0.0
        %1485 = vmatprep.subr.mxu0 0.0
        %1486 = vmatpush1.msra.mxu0 0.0
        %1487 = vmatprep.subr.mxu0 0.0
        %1488 = vmatpush1.msra.mxu0 0.0
        %1489 = vmatprep.subr.mxu0 0.0
        %1490 = vmatpush1.msra.mxu0 0.0
        %1491 = vmatprep.subr.mxu0 0.0
        %1492 = vmatpush1.msra.mxu0 0.0
        %1493 = vmatprep.subr.mxu0 0.0
        %1494 = vmatpush1.msra.mxu0 0.0
        %1495 = vmatprep.subr.mxu0 0.0
        %1496 = vmatpush1.msra.mxu0 0.0
        %1497 = vmatprep.subr.mxu0 0.0
        %1498 = vmatpush1.msra.mxu0 0.0
        %1499 = vmatprep.subr.mxu0 0.0
        %1500 = vmatpush1.msra.mxu0 0.0
        %1501 = vmatprep.subr.mxu0 0.0
        %1502 = vmatpush1.msra.mxu0 0.0
        %1503 = vmatprep.subr.mxu0 0.0
        %1504 = vmatpush1.msra.mxu0 0.0
        %1505 = vmatprep.mubr.f32.mxu0 0.0
        %1506 = vmatmul.mubr.f32.gmra.mrb[0].mxu0 %v1435
        %v1507 = vpop.f32.mrb[0].mxu0
        %v1508 = vadd.f32 0.0, %v1507
        %v1509 = vpop.f32.mrb[0].mxu0
        %v1510 = vadd.f32 0.0, %v1509
        %1511 = vdwg.mxu0
        %v1513 = vsel %vm1433, %v1324, 0
        %v1516 = vsel %vm1433, %v1325, 0
        %v1519 = vsel %vm1433, %v1326, 0
        %v1522 = vsel %vm1433, %v1327, 0
        %v1525 = vsel %vm1433, %v1328, 0
        %v1528 = vsel %vm1433, %v1329, 0
        %v1531 = vsel %vm1433, %v1330, 0
        %v1534 = vsel %vm1433, %v1331, 0
        %v1537 = vsel %vm1433, %v1332, 0
        %v1540 = vsel %vm1433, %v1333, 0
        %v1543 = vsel %vm1433, %v1334, 0
        %v1546 = vsel %vm1433, %v1335, 0
        %v1549 = vsel %vm1433, %v1336, 0
        %v1552 = vsel %vm1433, %v1337, 0
        %v1555 = vsel %vm1433, %v1338, 0
        %v1558 = vsel %vm1433, %v1339, 0
        %v1561 = vsel %vm947, %v1508, 0
        %v1564 = vsel %vm947, %v1510, 0
        %1566 = vmatprep.subr.mxu0 %v1564
        %1567 = vmatpush1.msra.mxu0 %v1561
        %1568 = vmatprep.subr.mxu0 0.0
        %1569 = vmatpush1.msra.mxu0 0.0
        %1570 = vmatprep.subr.mxu0 0.0
        %1571 = vmatpush1.msra.mxu0 0.0
        %1572 = vmatprep.subr.mxu0 0.0
        %1573 = vmatpush1.msra.mxu0 0.0
        %1574 = vmatprep.subr.mxu0 0.0
        %1575 = vmatpush1.msra.mxu0 0.0
        %1576 = vmatprep.subr.mxu0 0.0
        %1577 = vmatpush1.msra.mxu0 0.0
        %1578 = vmatprep.subr.mxu0 0.0
        %1579 = vmatpush1.msra.mxu0 0.0
        %1580 = vmatprep.subr.mxu0 0.0
        %1581 = vmatpush1.msra.mxu0 0.0
        %1582 = vmatprep.subr.mxu0 0.0
        %1583 = vmatpush1.msra.mxu0 0.0
        %1584 = vmatprep.subr.mxu0 0.0
        %1585 = vmatpush1.msra.mxu0 0.0
        %1586 = vmatprep.subr.mxu0 0.0
        %1587 = vmatpush1.msra.mxu0 0.0
        %1588 = vmatprep.subr.mxu0 0.0
        %1589 = vmatpush1.msra.mxu0 0.0
        %1590 = vmatprep.subr.mxu0 0.0
        %1591 = vmatpush1.msra.mxu0 0.0
        %1592 = vmatprep.subr.mxu0 0.0
        %1593 = vmatpush1.msra.mxu0 0.0
        %1594 = vmatprep.subr.mxu0 0.0
        %1595 = vmatpush1.msra.mxu0 0.0
        %1596 = vmatprep.subr.mxu0 0.0
        %1597 = vmatpush1.msra.mxu0 0.0
        %1598 = vmatprep.subr.mxu0 0.0
        %1599 = vmatpush1.msra.mxu0 0.0
        %1600 = vmatprep.subr.mxu0 0.0
        %1601 = vmatpush1.msra.mxu0 0.0
        %1602 = vmatprep.subr.mxu0 0.0
        %1603 = vmatpush1.msra.mxu0 0.0
        %1604 = vmatprep.subr.mxu0 0.0
        %1605 = vmatpush1.msra.mxu0 0.0
        %1606 = vmatprep.subr.mxu0 0.0
        %1607 = vmatpush1.msra.mxu0 0.0
        %1608 = vmatprep.subr.mxu0 0.0
        %1609 = vmatpush1.msra.mxu0 0.0
        %1610 = vmatprep.subr.mxu0 0.0
        %1611 = vmatpush1.msra.mxu0 0.0
        %1612 = vmatprep.subr.mxu0 0.0
        %1613 = vmatpush1.msra.mxu0 0.0
        %1614 = vmatprep.subr.mxu0 0.0
        %1615 = vmatpush1.msra.mxu0 0.0
        %1616 = vmatprep.subr.mxu0 0.0
        %1617 = vmatpush1.msra.mxu0 0.0
        %1618 = vmatprep.subr.mxu0 0.0
        %1619 = vmatpush1.msra.mxu0 0.0
        %1620 = vmatprep.subr.mxu0 0.0
        %1621 = vmatpush1.msra.mxu0 0.0
        %1622 = vmatprep.subr.mxu0 0.0
        %1623 = vmatpush1.msra.mxu0 0.0
        %1624 = vmatprep.subr.mxu0 0.0
        %1625 = vmatpush1.msra.mxu0 0.0
        %1626 = vmatprep.subr.mxu0 0.0
        %1627 = vmatpush1.msra.mxu0 0.0
        %1628 = vmatprep.subr.mxu0 0.0
        %1629 = vmatpush1.msra.mxu0 0.0
        %1630 = vmatprep.mubr.f32.mxu0 0.0
        %1631 = vmatmul.mubr.f32.gmra.mrb[0].mxu0 %v1513
        %v1632 = vpop.f32.mrb[0].mxu0
        %v1633 = vadd.f32 0.0, %v1632
        %v1634 = vpop.f32.mrb[0].mxu0
        %v1635 = vadd.f32 0.0, %v1634
        %1636 = vmatprep.mubr.f32.mxu0 0.0
        %1637 = vmatmul.mubr.f32.gmra.mrb[0].mxu0 %v1516
        %v1638 = vpop.f32.mrb[0].mxu0
        %v1639 = vadd.f32 0.0, %v1638
        %v1640 = vpop.f32.mrb[0].mxu0
        %v1641 = vadd.f32 0.0, %v1640
        %1642 = vmatprep.mubr.f32.mxu0 0.0
        %1643 = vmatmul.mubr.f32.gmra.mrb[0].mxu0 %v1519
        %v1644 = vpop.f32.mrb[0].mxu0
        %v1645 = vadd.f32 0.0, %v1644
        %v1646 = vpop.f32.mrb[0].mxu0
        %v1647 = vadd.f32 0.0, %v1646
        %1648 = vmatprep.mubr.f32.mxu0 0.0
        %1649 = vmatmul.mubr.f32.gmra.mrb[0].mxu0 %v1522
        %v1650 = vpop.f32.mrb[0].mxu0
        %v1651 = vadd.f32 0.0, %v1650
        %v1652 = vpop.f32.mrb[0].mxu0
        %v1653 = vadd.f32 0.0, %v1652
        %1654 = vmatprep.mubr.f32.mxu0 0.0
        %1655 = vmatmul.mubr.f32.gmra.mrb[0].mxu0 %v1525
        %v1656 = vpop.f32.mrb[0].mxu0
        %v1657 = vadd.f32 0.0, %v1656
        %v1658 = vpop.f32.mrb[0].mxu0
        %v1659 = vadd.f32 0.0, %v1658
        %1660 = vmatprep.mubr.f32.mxu0 0.0
        %1661 = vmatmul.mubr.f32.gmra.mrb[0].mxu0 %v1528
        %v1662 = vpop.f32.mrb[0].mxu0
        %v1663 = vadd.f32 0.0, %v1662
        %v1664 = vpop.f32.mrb[0].mxu0
        %v1665 = vadd.f32 0.0, %v1664
        %1666 = vmatprep.mubr.f32.mxu0 0.0
        %1667 = vmatmul.mubr.f32.gmra.mrb[0].mxu0 %v1531
        %v1668 = vpop.f32.mrb[0].mxu0
        %v1669 = vadd.f32 0.0, %v1668
        %v1670 = vpop.f32.mrb[0].mxu0
        %v1671 = vadd.f32 0.0, %v1670
        %1672 = vmatprep.mubr.f32.mxu0 0.0
        %1673 = vmatmul.mubr.f32.gmra.mrb[0].mxu0 %v1534
        %v1674 = vpop.f32.mrb[0].mxu0
        %v1675 = vadd.f32 0.0, %v1674
        %v1676 = vpop.f32.mrb[0].mxu0
        %v1677 = vadd.f32 0.0, %v1676
        %1678 = vmatprep.mubr.f32.mxu0 0.0
        %1679 = vmatmul.mubr.f32.gmra.mrb[0].mxu0 %v1537
        %v1680 = vpop.f32.mrb[0].mxu0
        %v1681 = vadd.f32 0.0, %v1680
        %v1682 = vpop.f32.mrb[0].mxu0
        %v1683 = vadd.f32 0.0, %v1682
        %1684 = vmatprep.mubr.f32.mxu0 0.0
        %1685 = vmatmul.mubr.f32.gmra.mrb[0].mxu0 %v1540
        %v1686 = vpop.f32.mrb[0].mxu0
        %v1687 = vadd.f32 0.0, %v1686
        %v1688 = vpop.f32.mrb[0].mxu0
        %v1689 = vadd.f32 0.0, %v1688
        %1690 = vmatprep.mubr.f32.mxu0 0.0
        %1691 = vmatmul.mubr.f32.gmra.mrb[0].mxu0 %v1543
        %v1692 = vpop.f32.mrb[0].mxu0
        %v1693 = vadd.f32 0.0, %v1692
        %v1694 = vpop.f32.mrb[0].mxu0
        %v1695 = vadd.f32 0.0, %v1694
        %1696 = vmatprep.mubr.f32.mxu0 0.0
        %1697 = vmatmul.mubr.f32.gmra.mrb[0].mxu0 %v1546
        %v1698 = vpop.f32.mrb[0].mxu0
        %v1699 = vadd.f32 0.0, %v1698
        %v1700 = vpop.f32.mrb[0].mxu0
        %v1701 = vadd.f32 0.0, %v1700
        %1702 = vmatprep.mubr.f32.mxu0 0.0
        %1703 = vmatmul.mubr.f32.gmra.mrb[0].mxu0 %v1549
        %v1704 = vpop.f32.mrb[0].mxu0
        %v1705 = vadd.f32 0.0, %v1704
        %v1706 = vpop.f32.mrb[0].mxu0
        %v1707 = vadd.f32 0.0, %v1706
        %1708 = vmatprep.mubr.f32.mxu0 0.0
        %1709 = vmatmul.mubr.f32.gmra.mrb[0].mxu0 %v1552
        %v1710 = vpop.f32.mrb[0].mxu0
        %v1711 = vadd.f32 0.0, %v1710
        %v1712 = vpop.f32.mrb[0].mxu0
        %v1713 = vadd.f32 0.0, %v1712
        %1714 = vmatprep.mubr.f32.mxu0 0.0
        %1715 = vmatmul.mubr.f32.gmra.mrb[0].mxu0 %v1555
        %v1716 = vpop.f32.mrb[0].mxu0
        %v1717 = vadd.f32 0.0, %v1716
        %v1718 = vpop.f32.mrb[0].mxu0
        %v1719 = vadd.f32 0.0, %v1718
        %1720 = vmatprep.mubr.f32.mxu0 0.0
        %1721 = vmatmul.mubr.f32.gmra.mrb[0].mxu0 %v1558
        %v1722 = vpop.f32.mrb[0].mxu0
        %v1723 = vadd.f32 0.0, %v1722
        %v1724 = vpop.f32.mrb[0].mxu0
        %v1725 = vadd.f32 0.0, %v1724
        %1726 = vdwg.mxu0
        %1727 = vst [vmem:[%s533] sm:$0xff] %v1633
        %1728 = vst [vmem:[%s533 + $0x8] sm:$0xff] %v1635
        %1729 = vst [vmem:[%s533 + $0x10] sm:$0xff] %v1639
        %1730 = vst [vmem:[%s533 + $0x18] sm:$0xff] %v1641
        %1731 = vst [vmem:[%s533 + $0x20] sm:$0xff] %v1645
        %1732 = vst [vmem:[%s533 + $0x28] sm:$0xff] %v1647
        %1733 = vst [vmem:[%s533 + $0x30] sm:$0xff] %v1651
        %1734 = vst [vmem:[%s533 + $0x38] sm:$0xff] %v1653
        %1735 = vst [vmem:[%s533 + $0x40] sm:$0xff] %v1657
        %1736 = vst [vmem:[%s533 + $0x48] sm:$0xff] %v1659
        %1737 = vst [vmem:[%s533 + $0x50] sm:$0xff] %v1663
        %1738 = vst [vmem:[%s533 + $0x58] sm:$0xff] %v1665
        %1739 = vst [vmem:[%s533 + $0x60] sm:$0xff] %v1669
        %1740 = vst [vmem:[%s533 + $0x68] sm:$0xff] %v1671
        %1741 = vst [vmem:[%s533 + $0x70] sm:$0xff] %v1675
        %1742 = vst [vmem:[%s533 + $0x78] sm:$0xff] %v1677
        %1743 = vst [vmem:[%s533 + $0x80] sm:$0xff] %v1681
        %1744 = vst [vmem:[%s533 + $0x88] sm:$0xff] %v1683
        %1745 = vst [vmem:[%s533 + $0x90] sm:$0xff] %v1687
        %1746 = vst [vmem:[%s533 + $0x98] sm:$0xff] %v1689
        %1747 = vst [vmem:[%s533 + $0xa0] sm:$0xff] %v1693
        %1748 = vst [vmem:[%s533 + $0xa8] sm:$0xff] %v1695
        %1749 = vst [vmem:[%s533 + $0xb0] sm:$0xff] %v1699
        %1750 = vst [vmem:[%s533 + $0xb8] sm:$0xff] %v1701
        %1751 = vst [vmem:[%s533 + $0xc0] sm:$0xff] %v1705
        %1752 = vst [vmem:[%s533 + $0xc8] sm:$0xff] %v1707
        %1753 = vst [vmem:[%s533 + $0xd0] sm:$0xff] %v1711
        %1754 = vst [vmem:[%s533 + $0xd8] sm:$0xff] %v1713
        %1755 = vst [vmem:[%s533 + $0xe0] sm:$0xff] %v1717
        %1756 = vst [vmem:[%s533 + $0xe8] sm:$0xff] %v1719
        %1757 = vst [vmem:[%s533 + $0xf0] sm:$0xff] %v1723
        %1758 = vst [vmem:[%s533 + $0xf8] sm:$0xff] %v1725
        %s1759 = scalar_lea.vmem %s7, 64
        %v1760 = vld [vmem:[%s1759] sm:$0xff]
        %v1761 = vld [vmem:[%s1759 + $0x8] sm:$0xff]
        %v1762 = vld [vmem:[%s1759 + $0x10] sm:$0xff]
        %v1763 = vld [vmem:[%s1759 + $0x18] sm:$0xff]
        %v1764 = vld [vmem:[%s1759 + $0x20] sm:$0xff]
        %v1765 = vld [vmem:[%s1759 + $0x28] sm:$0xff]
        %v1766 = vld [vmem:[%s1759 + $0x30] sm:$0xff]
        %v1767 = vld [vmem:[%s1759 + $0x38] sm:$0xff]
        %s1768 = scalar_lea.vmem %s8, 1
        %v1769 = vld [vmem:[%s1768] sm:$0x1]
        %v1771 = vlaneseq
        %v1772 = vshrl.u32 %v1771, 7
        %v1773 = vsub.s32 0, %v1772
        %v1774 = vrot.slane %v1769, %v1773
        %1775 = vset.pattern.permute.xlu0 0
        %1776 = vperm.xlu0 %1775, %v1774
        %v1777 = vpop.permute.xlu0 %1776
        %1779 = vmatprep.subr.mxu0 0.0
        %1780 = vmatpush1.msra.mxu0 %v1760
        %1781 = vmatprep.subr.mxu0 0.0
        %1782 = vmatpush1.msra.mxu0 %v1761
        %1783 = vmatprep.subr.mxu0 0.0
        %1784 = vmatpush1.msra.mxu0 %v1762
        %1785 = vmatprep.subr.mxu0 0.0
        %1786 = vmatpush1.msra.mxu0 %v1763
        %1787 = vmatprep.subr.mxu0 0.0
        %1788 = vmatpush1.msra.mxu0 %v1764
        %1789 = vmatprep.subr.mxu0 0.0
        %1790 = vmatpush1.msra.mxu0 %v1765
        %1791 = vmatprep.subr.mxu0 0.0
        %1792 = vmatpush1.msra.mxu0 %v1766
        %1793 = vmatprep.subr.mxu0 0.0
        %1794 = vmatpush1.msra.mxu0 %v1767
        %1795 = vmatprep.subr.mxu0 0.0
        %1796 = vmatpush1.msra.mxu0 0.0
        %1797 = vmatprep.subr.mxu0 0.0
        %1798 = vmatpush1.msra.mxu0 0.0
        %1799 = vmatprep.subr.mxu0 0.0
        %1800 = vmatpush1.msra.mxu0 0.0
        %1801 = vmatprep.subr.mxu0 0.0
        %1802 = vmatpush1.msra.mxu0 0.0
        %1803 = vmatprep.subr.mxu0 0.0
        %1804 = vmatpush1.msra.mxu0 0.0
        %1805 = vmatprep.subr.mxu0 0.0
        %1806 = vmatpush1.msra.mxu0 0.0
        %1807 = vmatprep.subr.mxu0 0.0
        %1808 = vmatpush1.msra.mxu0 0.0
        %1809 = vmatprep.subr.mxu0 0.0
        %1810 = vmatpush1.msra.mxu0 0.0
        %1811 = vmatprep.subr.mxu0 0.0
        %1812 = vmatpush1.msra.mxu0 0.0
        %1813 = vmatprep.subr.mxu0 0.0
        %1814 = vmatpush1.msra.mxu0 0.0
        %1815 = vmatprep.subr.mxu0 0.0
        %1816 = vmatpush1.msra.mxu0 0.0
        %1817 = vmatprep.subr.mxu0 0.0
        %1818 = vmatpush1.msra.mxu0 0.0
        %1819 = vmatprep.subr.mxu0 0.0
        %1820 = vmatpush1.msra.mxu0 0.0
        %1821 = vmatprep.subr.mxu0 0.0
        %1822 = vmatpush1.msra.mxu0 0.0
        %1823 = vmatprep.subr.mxu0 0.0
        %1824 = vmatpush1.msra.mxu0 0.0
        %1825 = vmatprep.subr.mxu0 0.0
        %1826 = vmatpush1.msra.mxu0 0.0
        %1827 = vmatprep.subr.mxu0 0.0
        %1828 = vmatpush1.msra.mxu0 0.0
        %1829 = vmatprep.subr.mxu0 0.0
        %1830 = vmatpush1.msra.mxu0 0.0
        %1831 = vmatprep.subr.mxu0 0.0
        %1832 = vmatpush1.msra.mxu0 0.0
        %1833 = vmatprep.subr.mxu0 0.0
        %1834 = vmatpush1.msra.mxu0 0.0
        %1835 = vmatprep.subr.mxu0 0.0
        %1836 = vmatpush1.msra.mxu0 0.0
        %1837 = vmatprep.subr.mxu0 0.0
        %1838 = vmatpush1.msra.mxu0 0.0
        %1839 = vmatprep.subr.mxu0 0.0
        %1840 = vmatpush1.msra.mxu0 0.0
        %1841 = vmatprep.subr.mxu0 0.0
        %1842 = vmatpush1.msra.mxu0 0.0
        %1843 = vmatprep.mubr.f32.mxu0 0.0
        %1844 = vmatmul.mubr.f32.gmra.mrb[0].mxu0 %v1359
        %v1845 = vpop.f32.mrb[0].mxu0
        %v1846 = vadd.f32 %v1777, %v1845
        %v1847 = vpop.f32.mrb[0].mxu0
        %1848 = vdwg.mxu0
        %v1850 = vsel %vm1433, %v1846, 0
        %1852 = vmatprep.subr.mxu0 %v1439
        %1853 = vmatpush1.msra.mxu0 %v1437
        %1854 = vmatprep.subr.mxu0 0.0
        %1855 = vmatpush1.msra.mxu0 0.0
        %1856 = vmatprep.subr.mxu0 0.0
        %1857 = vmatpush1.msra.mxu0 0.0
        %1858 = vmatprep.subr.mxu0 0.0
        %1859 = vmatpush1.msra.mxu0 0.0
        %1860 = vmatprep.subr.mxu0 0.0
        %1861 = vmatpush1.msra.mxu0 0.0
        %1862 = vmatprep.subr.mxu0 0.0
        %1863 = vmatpush1.msra.mxu0 0.0
        %1864 = vmatprep.subr.mxu0 0.0
        %1865 = vmatpush1.msra.mxu0 0.0
        %1866 = vmatprep.subr.mxu0 0.0
        %1867 = vmatpush1.msra.mxu0 0.0
        %1868 = vmatprep.subr.mxu0 0.0
        %1869 = vmatpush1.msra.mxu0 0.0
        %1870 = vmatprep.subr.mxu0 0.0
        %1871 = vmatpush1.msra.mxu0 0.0
        %1872 = vmatprep.subr.mxu0 0.0
        %1873 = vmatpush1.msra.mxu0 0.0
        %1874 = vmatprep.subr.mxu0 0.0
        %1875 = vmatpush1.msra.mxu0 0.0
        %1876 = vmatprep.subr.mxu0 0.0
        %1877 = vmatpush1.msra.mxu0 0.0
        %1878 = vmatprep.subr.mxu0 0.0
        %1879 = vmatpush1.msra.mxu0 0.0
        %1880 = vmatprep.subr.mxu0 0.0
        %1881 = vmatpush1.msra.mxu0 0.0
        %1882 = vmatprep.subr.mxu0 0.0
        %1883 = vmatpush1.msra.mxu0 0.0
        %1884 = vmatprep.subr.mxu0 0.0
        %1885 = vmatpush1.msra.mxu0 0.0
        %1886 = vmatprep.subr.mxu0 0.0
        %1887 = vmatpush1.msra.mxu0 0.0
        %1888 = vmatprep.subr.mxu0 0.0
        %1889 = vmatpush1.msra.mxu0 0.0
        %1890 = vmatprep.subr.mxu0 0.0
        %1891 = vmatpush1.msra.mxu0 0.0
        %1892 = vmatprep.subr.mxu0 0.0
        %1893 = vmatpush1.msra.mxu0 0.0
        %1894 = vmatprep.subr.mxu0 0.0
        %1895 = vmatpush1.msra.mxu0 0.0
        %1896 = vmatprep.subr.mxu0 0.0
        %1897 = vmatpush1.msra.mxu0 0.0
        %1898 = vmatprep.subr.mxu0 0.0
        %1899 = vmatpush1.msra.mxu0 0.0
        %1900 = vmatprep.subr.mxu0 0.0
        %1901 = vmatpush1.msra.mxu0 0.0
        %1902 = vmatprep.subr.mxu0 0.0
        %1903 = vmatpush1.msra.mxu0 0.0
        %1904 = vmatprep.subr.mxu0 0.0
        %1905 = vmatpush1.msra.mxu0 0.0
        %1906 = vmatprep.subr.mxu0 0.0
        %1907 = vmatpush1.msra.mxu0 0.0
        %1908 = vmatprep.subr.mxu0 0.0
        %1909 = vmatpush1.msra.mxu0 0.0
        %1910 = vmatprep.subr.mxu0 0.0
        %1911 = vmatpush1.msra.mxu0 0.0
        %1912 = vmatprep.subr.mxu0 0.0
        %1913 = vmatpush1.msra.mxu0 0.0
        %1914 = vmatprep.subr.mxu0 0.0
        %1915 = vmatpush1.msra.mxu0 0.0
        %1916 = vmatprep.mubr.f32.mxu0 0.0
        %1917 = vmatmul.mubr.f32.gmra.mrb[0].mxu0 %v1850
        %v1918 = vpop.f32.mrb[0].mxu0
        %v1919 = vadd.f32 0.0, %v1918
        %v1920 = vpop.f32.mrb[0].mxu0
        %v1921 = vadd.f32 0.0, %v1920
        %1922 = vdwg.mxu0
        %v1924 = vsel %vm947, %v1919, 0
        %v1927 = vsel %vm947, %v1921, 0
        %1929 = vmatprep.subr.mxu0 %v1927
        %1930 = vmatpush1.msra.mxu0 %v1924
        %1931 = vmatprep.subr.mxu0 0.0
        %1932 = vmatpush1.msra.mxu0 0.0
        %1933 = vmatprep.subr.mxu0 0.0
        %1934 = vmatpush1.msra.mxu0 0.0
        %1935 = vmatprep.subr.mxu0 0.0
        %1936 = vmatpush1.msra.mxu0 0.0
        %1937 = vmatprep.subr.mxu0 0.0
        %1938 = vmatpush1.msra.mxu0 0.0
        %1939 = vmatprep.subr.mxu0 0.0
        %1940 = vmatpush1.msra.mxu0 0.0
        %1941 = vmatprep.subr.mxu0 0.0
        %1942 = vmatpush1.msra.mxu0 0.0
        %1943 = vmatprep.subr.mxu0 0.0
        %1944 = vmatpush1.msra.mxu0 0.0
        %1945 = vmatprep.subr.mxu0 0.0
        %1946 = vmatpush1.msra.mxu0 0.0
        %1947 = vmatprep.subr.mxu0 0.0
        %1948 = vmatpush1.msra.mxu0 0.0
        %1949 = vmatprep.subr.mxu0 0.0
        %1950 = vmatpush1.msra.mxu0 0.0
        %1951 = vmatprep.subr.mxu0 0.0
        %1952 = vmatpush1.msra.mxu0 0.0
        %1953 = vmatprep.subr.mxu0 0.0
        %1954 = vmatpush1.msra.mxu0 0.0
        %1955 = vmatprep.subr.mxu0 0.0
        %1956 = vmatpush1.msra.mxu0 0.0
        %1957 = vmatprep.subr.mxu0 0.0
        %1958 = vmatpush1.msra.mxu0 0.0
        %1959 = vmatprep.subr.mxu0 0.0
        %1960 = vmatpush1.msra.mxu0 0.0
        %1961 = vmatprep.subr.mxu0 0.0
        %1962 = vmatpush1.msra.mxu0 0.0
        %1963 = vmatprep.subr.mxu0 0.0
        %1964 = vmatpush1.msra.mxu0 0.0
        %1965 = vmatprep.subr.mxu0 0.0
        %1966 = vmatpush1.msra.mxu0 0.0
        %1967 = vmatprep.subr.mxu0 0.0
        %1968 = vmatpush1.msra.mxu0 0.0
        %1969 = vmatprep.subr.mxu0 0.0
        %1970 = vmatpush1.msra.mxu0 0.0
        %1971 = vmatprep.subr.mxu0 0.0
        %1972 = vmatpush1.msra.mxu0 0.0
        %1973 = vmatprep.subr.mxu0 0.0
        %1974 = vmatpush1.msra.mxu0 0.0
        %1975 = vmatprep.subr.mxu0 0.0
        %1976 = vmatpush1.msra.mxu0 0.0
        %1977 = vmatprep.subr.mxu0 0.0
        %1978 = vmatpush1.msra.mxu0 0.0
        %1979 = vmatprep.subr.mxu0 0.0
        %1980 = vmatpush1.msra.mxu0 0.0
        %1981 = vmatprep.subr.mxu0 0.0
        %1982 = vmatpush1.msra.mxu0 0.0
        %1983 = vmatprep.subr.mxu0 0.0
        %1984 = vmatpush1.msra.mxu0 0.0
        %1985 = vmatprep.subr.mxu0 0.0
        %1986 = vmatpush1.msra.mxu0 0.0
        %1987 = vmatprep.subr.mxu0 0.0
        %1988 = vmatpush1.msra.mxu0 0.0
        %1989 = vmatprep.subr.mxu0 0.0
        %1990 = vmatpush1.msra.mxu0 0.0
        %1991 = vmatprep.subr.mxu0 0.0
        %1992 = vmatpush1.msra.mxu0 0.0
        %1993 = vmatprep.mubr.f32.mxu0 0.0
        %1994 = vmatmul.mubr.f32.gmra.mrb[0].mxu0 %v1513
        %v1995 = vpop.f32.mrb[0].mxu0
        %v1996 = vadd.f32 0.0, %v1995
        %v1997 = vpop.f32.mrb[0].mxu0
        %v1998 = vadd.f32 0.0, %v1997
        %1999 = vmatprep.mubr.f32.mxu0 0.0
        %2000 = vmatmul.mubr.f32.gmra.mrb[0].mxu0 %v1516
        %v2001 = vpop.f32.mrb[0].mxu0
        %v2002 = vadd.f32 0.0, %v2001
        %v2003 = vpop.f32.mrb[0].mxu0
        %v2004 = vadd.f32 0.0, %v2003
        %2005 = vmatprep.mubr.f32.mxu0 0.0
        %2006 = vmatmul.mubr.f32.gmra.mrb[0].mxu0 %v1519
        %v2007 = vpop.f32.mrb[0].mxu0
        %v2008 = vadd.f32 0.0, %v2007
        %v2009 = vpop.f32.mrb[0].mxu0
        %v2010 = vadd.f32 0.0, %v2009
        %2011 = vmatprep.mubr.f32.mxu0 0.0
        %2012 = vmatmul.mubr.f32.gmra.mrb[0].mxu0 %v1522
        %v2013 = vpop.f32.mrb[0].mxu0
        %v2014 = vadd.f32 0.0, %v2013
        %v2015 = vpop.f32.mrb[0].mxu0
        %v2016 = vadd.f32 0.0, %v2015
        %2017 = vmatprep.mubr.f32.mxu0 0.0
        %2018 = vmatmul.mubr.f32.gmra.mrb[0].mxu0 %v1525
        %v2019 = vpop.f32.mrb[0].mxu0
        %v2020 = vadd.f32 0.0, %v2019
        %v2021 = vpop.f32.mrb[0].mxu0
        %v2022 = vadd.f32 0.0, %v2021
        %2023 = vmatprep.mubr.f32.mxu0 0.0
        %2024 = vmatmul.mubr.f32.gmra.mrb[0].mxu0 %v1528
        %v2025 = vpop.f32.mrb[0].mxu0
        %v2026 = vadd.f32 0.0, %v2025
        %v2027 = vpop.f32.mrb[0].mxu0
        %v2028 = vadd.f32 0.0, %v2027
        %2029 = vmatprep.mubr.f32.mxu0 0.0
        %2030 = vmatmul.mubr.f32.gmra.mrb[0].mxu0 %v1531
        %v2031 = vpop.f32.mrb[0].mxu0
        %v2032 = vadd.f32 0.0, %v2031
        %v2033 = vpop.f32.mrb[0].mxu0
        %v2034 = vadd.f32 0.0, %v2033
        %2035 = vmatprep.mubr.f32.mxu0 0.0
        %2036 = vmatmul.mubr.f32.gmra.mrb[0].mxu0 %v1534
        %v2037 = vpop.f32.mrb[0].mxu0
        %v2038 = vadd.f32 0.0, %v2037
        %v2039 = vpop.f32.mrb[0].mxu0
        %v2040 = vadd.f32 0.0, %v2039
        %2041 = vmatprep.mubr.f32.mxu0 0.0
        %2042 = vmatmul.mubr.f32.gmra.mrb[0].mxu0 %v1537
        %v2043 = vpop.f32.mrb[0].mxu0
        %v2044 = vadd.f32 0.0, %v2043
        %v2045 = vpop.f32.mrb[0].mxu0
        %v2046 = vadd.f32 0.0, %v2045
        %2047 = vmatprep.mubr.f32.mxu0 0.0
        %2048 = vmatmul.mubr.f32.gmra.mrb[0].mxu0 %v1540
        %v2049 = vpop.f32.mrb[0].mxu0
        %v2050 = vadd.f32 0.0, %v2049
        %v2051 = vpop.f32.mrb[0].mxu0
        %v2052 = vadd.f32 0.0, %v2051
        %2053 = vmatprep.mubr.f32.mxu0 0.0
        %2054 = vmatmul.mubr.f32.gmra.mrb[0].mxu0 %v1543
        %v2055 = vpop.f32.mrb[0].mxu0
        %v2056 = vadd.f32 0.0, %v2055
        %v2057 = vpop.f32.mrb[0].mxu0
        %v2058 = vadd.f32 0.0, %v2057
        %2059 = vmatprep.mubr.f32.mxu0 0.0
        %2060 = vmatmul.mubr.f32.gmra.mrb[0].mxu0 %v1546
        %v2061 = vpop.f32.mrb[0].mxu0
        %v2062 = vadd.f32 0.0, %v2061
        %v2063 = vpop.f32.mrb[0].mxu0
        %v2064 = vadd.f32 0.0, %v2063
        %2065 = vmatprep.mubr.f32.mxu0 0.0
        %2066 = vmatmul.mubr.f32.gmra.mrb[0].mxu0 %v1549
        %v2067 = vpop.f32.mrb[0].mxu0
        %v2068 = vadd.f32 0.0, %v2067
        %v2069 = vpop.f32.mrb[0].mxu0
        %v2070 = vadd.f32 0.0, %v2069
        %2071 = vmatprep.mubr.f32.mxu0 0.0
        %2072 = vmatmul.mubr.f32.gmra.mrb[0].mxu0 %v1552
        %v2073 = vpop.f32.mrb[0].mxu0
        %v2074 = vadd.f32 0.0, %v2073
        %v2075 = vpop.f32.mrb[0].mxu0
        %v2076 = vadd.f32 0.0, %v2075
        %2077 = vmatprep.mubr.f32.mxu0 0.0
        %2078 = vmatmul.mubr.f32.gmra.mrb[0].mxu0 %v1555
        %v2079 = vpop.f32.mrb[0].mxu0
        %v2080 = vadd.f32 0.0, %v2079
        %v2081 = vpop.f32.mrb[0].mxu0
        %v2082 = vadd.f32 0.0, %v2081
        %2083 = vmatprep.mubr.f32.mxu0 0.0
        %2084 = vmatmul.mubr.f32.gmra.mrb[0].mxu0 %v1558
        %v2085 = vpop.f32.mrb[0].mxu0
        %v2086 = vadd.f32 0.0, %v2085
        %v2087 = vpop.f32.mrb[0].mxu0
        %v2088 = vadd.f32 0.0, %v2087
        %2089 = vdwg.mxu0
        %s2090 = scalar_lea.vmem %s533, 256 [#allocation14]
        %2091 = vst [vmem:[%s2090] sm:$0xff] %v1996
        %2092 = vst [vmem:[%s2090 + $0x8] sm:$0xff] %v1998
        %2093 = vst [vmem:[%s2090 + $0x10] sm:$0xff] %v2002
        %2094 = vst [vmem:[%s2090 + $0x18] sm:$0xff] %v2004
        %2095 = vst [vmem:[%s2090 + $0x20] sm:$0xff] %v2008
        %2096 = vst [vmem:[%s2090 + $0x28] sm:$0xff] %v2010
        %2097 = vst [vmem:[%s2090 + $0x30] sm:$0xff] %v2014
        %2098 = vst [vmem:[%s2090 + $0x38] sm:$0xff] %v2016
        %2099 = vst [vmem:[%s2090 + $0x40] sm:$0xff] %v2020
        %2100 = vst [vmem:[%s2090 + $0x48] sm:$0xff] %v2022
        %2101 = vst [vmem:[%s2090 + $0x50] sm:$0xff] %v2026
        %2102 = vst [vmem:[%s2090 + $0x58] sm:$0xff] %v2028
        %2103 = vst [vmem:[%s2090 + $0x60] sm:$0xff] %v2032
        %2104 = vst [vmem:[%s2090 + $0x68] sm:$0xff] %v2034
        %2105 = vst [vmem:[%s2090 + $0x70] sm:$0xff] %v2038
        %2106 = vst [vmem:[%s2090 + $0x78] sm:$0xff] %v2040
        %2107 = vst [vmem:[%s2090 + $0x80] sm:$0xff] %v2044
        %2108 = vst [vmem:[%s2090 + $0x88] sm:$0xff] %v2046
        %2109 = vst [vmem:[%s2090 + $0x90] sm:$0xff] %v2050
        %2110 = vst [vmem:[%s2090 + $0x98] sm:$0xff] %v2052
        %2111 = vst [vmem:[%s2090 + $0xa0] sm:$0xff] %v2056
        %2112 = vst [vmem:[%s2090 + $0xa8] sm:$0xff] %v2058
        %2113 = vst [vmem:[%s2090 + $0xb0] sm:$0xff] %v2062
        %2114 = vst [vmem:[%s2090 + $0xb8] sm:$0xff] %v2064
        %2115 = vst [vmem:[%s2090 + $0xc0] sm:$0xff] %v2068
        %2116 = vst [vmem:[%s2090 + $0xc8] sm:$0xff] %v2070
        %2117 = vst [vmem:[%s2090 + $0xd0] sm:$0xff] %v2074
        %2118 = vst [vmem:[%s2090 + $0xd8] sm:$0xff] %v2076
        %2119 = vst [vmem:[%s2090 + $0xe0] sm:$0xff] %v2080
        %2120 = vst [vmem:[%s2090 + $0xe8] sm:$0xff] %v2082
        %2121 = vst [vmem:[%s2090 + $0xf0] sm:$0xff] %v2086
        %2122 = vst [vmem:[%s2090 + $0xf8] sm:$0xff] %v2088
        %s2123 = scalar_lea.vmem %s7, 128
        %v2124 = vld [vmem:[%s2123] sm:$0xff]
        %v2125 = vld [vmem:[%s2123 + $0x8] sm:$0xff]
        %v2126 = vld [vmem:[%s2123 + $0x10] sm:$0xff]
        %v2127 = vld [vmem:[%s2123 + $0x18] sm:$0xff]
        %v2128 = vld [vmem:[%s2123 + $0x20] sm:$0xff]
        %v2129 = vld [vmem:[%s2123 + $0x28] sm:$0xff]
        %v2130 = vld [vmem:[%s2123 + $0x30] sm:$0xff]
        %v2131 = vld [vmem:[%s2123 + $0x38] sm:$0xff]
        %s2132 = scalar_lea.vmem %s8, 2
        %v2133 = vld [vmem:[%s2132] sm:$0x1]
        %v2135 = vlaneseq
        %v2136 = vshrl.u32 %v2135, 7
        %v2137 = vsub.s32 0, %v2136
        %v2138 = vrot.slane %v2133, %v2137
        %2139 = vset.pattern.permute.xlu0 0
        %2140 = vperm.xlu0 %2139, %v2138
        %v2141 = vpop.permute.xlu0 %2140
        %2143 = vmatprep.subr.mxu0 0.0
        %2144 = vmatpush1.msra.mxu0 %v2124
        %2145 = vmatprep.subr.mxu0 0.0
        %2146 = vmatpush1.msra.mxu0 %v2125
        %2147 = vmatprep.subr.mxu0 0.0
        %2148 = vmatpush1.msra.mxu0 %v2126
        %2149 = vmatprep.subr.mxu0 0.0
        %2150 = vmatpush1.msra.mxu0 %v2127
        %2151 = vmatprep.subr.mxu0 0.0
        %2152 = vmatpush1.msra.mxu0 %v2128
        %2153 = vmatprep.subr.mxu0 0.0
        %2154 = vmatpush1.msra.mxu0 %v2129
        %2155 = vmatprep.subr.mxu0 0.0
        %2156 = vmatpush1.msra.mxu0 %v2130
        %2157 = vmatprep.subr.mxu0 0.0
        %2158 = vmatpush1.msra.mxu0 %v2131
        %2159 = vmatprep.subr.mxu0 0.0
        %2160 = vmatpush1.msra.mxu0 0.0
        %2161 = vmatprep.subr.mxu0 0.0
        %2162 = vmatpush1.msra.mxu0 0.0
        %2163 = vmatprep.subr.mxu0 0.0
        %2164 = vmatpush1.msra.mxu0 0.0
        %2165 = vmatprep.subr.mxu0 0.0
        %2166 = vmatpush1.msra.mxu0 0.0
        %2167 = vmatprep.subr.mxu0 0.0
        %2168 = vmatpush1.msra.mxu0 0.0
        %2169 = vmatprep.subr.mxu0 0.0
        %2170 = vmatpush1.msra.mxu0 0.0
        %2171 = vmatprep.subr.mxu0 0.0
        %2172 = vmatpush1.msra.mxu0 0.0
        %2173 = vmatprep.subr.mxu0 0.0
        %2174 = vmatpush1.msra.mxu0 0.0
        %2175 = vmatprep.subr.mxu0 0.0
        %2176 = vmatpush1.msra.mxu0 0.0
        %2177 = vmatprep.subr.mxu0 0.0
        %2178 = vmatpush1.msra.mxu0 0.0
        %2179 = vmatprep.subr.mxu0 0.0
        %2180 = vmatpush1.msra.mxu0 0.0
        %2181 = vmatprep.subr.mxu0 0.0
        %2182 = vmatpush1.msra.mxu0 0.0
        %2183 = vmatprep.subr.mxu0 0.0
        %2184 = vmatpush1.msra.mxu0 0.0
        %2185 = vmatprep.subr.mxu0 0.0
        %2186 = vmatpush1.msra.mxu0 0.0
        %2187 = vmatprep.subr.mxu0 0.0
        %2188 = vmatpush1.msra.mxu0 0.0
        %2189 = vmatprep.subr.mxu0 0.0
        %2190 = vmatpush1.msra.mxu0 0.0
        %2191 = vmatprep.subr.mxu0 0.0
        %2192 = vmatpush1.msra.mxu0 0.0
        %2193 = vmatprep.subr.mxu0 0.0
        %2194 = vmatpush1.msra.mxu0 0.0
        %2195 = vmatprep.subr.mxu0 0.0
        %2196 = vmatpush1.msra.mxu0 0.0
        %2197 = vmatprep.subr.mxu0 0.0
        %2198 = vmatpush1.msra.mxu0 0.0
        %2199 = vmatprep.subr.mxu0 0.0
        %2200 = vmatpush1.msra.mxu0 0.0
        %2201 = vmatprep.subr.mxu0 0.0
        %2202 = vmatpush1.msra.mxu0 0.0
        %2203 = vmatprep.subr.mxu0 0.0
        %2204 = vmatpush1.msra.mxu0 0.0
        %2205 = vmatprep.subr.mxu0 0.0
        %2206 = vmatpush1.msra.mxu0 0.0
        %2207 = vmatprep.mubr.f32.mxu0 0.0
        %2208 = vmatmul.mubr.f32.gmra.mrb[0].mxu0 %v1359
        %v2209 = vpop.f32.mrb[0].mxu0
        %v2210 = vadd.f32 %v2141, %v2209
        %v2211 = vpop.f32.mrb[0].mxu0
        %2212 = vdwg.mxu0
        %v2214 = vsel %vm1433, %v2210, 0
        %2216 = vmatprep.subr.mxu0 %v1439
        %2217 = vmatpush1.msra.mxu0 %v1437
        %2218 = vmatprep.subr.mxu0 0.0
        %2219 = vmatpush1.msra.mxu0 0.0
        %2220 = vmatprep.subr.mxu0 0.0
        %2221 = vmatpush1.msra.mxu0 0.0
        %2222 = vmatprep.subr.mxu0 0.0
        %2223 = vmatpush1.msra.mxu0 0.0
        %2224 = vmatprep.subr.mxu0 0.0
        %2225 = vmatpush1.msra.mxu0 0.0
        %2226 = vmatprep.subr.mxu0 0.0
        %2227 = vmatpush1.msra.mxu0 0.0
        %2228 = vmatprep.subr.mxu0 0.0
        %2229 = vmatpush1.msra.mxu0 0.0
        %2230 = vmatprep.subr.mxu0 0.0
        %2231 = vmatpush1.msra.mxu0 0.0
        %2232 = vmatprep.subr.mxu0 0.0
        %2233 = vmatpush1.msra.mxu0 0.0
        %2234 = vmatprep.subr.mxu0 0.0
        %2235 = vmatpush1.msra.mxu0 0.0
        %2236 = vmatprep.subr.mxu0 0.0
        %2237 = vmatpush1.msra.mxu0 0.0
        %2238 = vmatprep.subr.mxu0 0.0
        %2239 = vmatpush1.msra.mxu0 0.0
        %2240 = vmatprep.subr.mxu0 0.0
        %2241 = vmatpush1.msra.mxu0 0.0
        %2242 = vmatprep.subr.mxu0 0.0
        %2243 = vmatpush1.msra.mxu0 0.0
        %2244 = vmatprep.subr.mxu0 0.0
        %2245 = vmatpush1.msra.mxu0 0.0
        %2246 = vmatprep.subr.mxu0 0.0
        %2247 = vmatpush1.msra.mxu0 0.0
        %2248 = vmatprep.subr.mxu0 0.0
        %2249 = vmatpush1.msra.mxu0 0.0
        %2250 = vmatprep.subr.mxu0 0.0
        %2251 = vmatpush1.msra.mxu0 0.0
        %2252 = vmatprep.subr.mxu0 0.0
        %2253 = vmatpush1.msra.mxu0 0.0
        %2254 = vmatprep.subr.mxu0 0.0
        %2255 = vmatpush1.msra.mxu0 0.0
        %2256 = vmatprep.subr.mxu0 0.0
        %2257 = vmatpush1.msra.mxu0 0.0
        %2258 = vmatprep.subr.mxu0 0.0
        %2259 = vmatpush1.msra.mxu0 0.0
        %2260 = vmatprep.subr.mxu0 0.0
        %2261 = vmatpush1.msra.mxu0 0.0
        %2262 = vmatprep.subr.mxu0 0.0
        %2263 = vmatpush1.msra.mxu0 0.0
        %2264 = vmatprep.subr.mxu0 0.0
        %2265 = vmatpush1.msra.mxu0 0.0
        %2266 = vmatprep.subr.mxu0 0.0
        %2267 = vmatpush1.msra.mxu0 0.0
        %2268 = vmatprep.subr.mxu0 0.0
        %2269 = vmatpush1.msra.mxu0 0.0
        %2270 = vmatprep.subr.mxu0 0.0
        %2271 = vmatpush1.msra.mxu0 0.0
        %2272 = vmatprep.subr.mxu0 0.0
        %2273 = vmatpush1.msra.mxu0 0.0
        %2274 = vmatprep.subr.mxu0 0.0
        %2275 = vmatpush1.msra.mxu0 0.0
        %2276 = vmatprep.subr.mxu0 0.0
        %2277 = vmatpush1.msra.mxu0 0.0
        %2278 = vmatprep.subr.mxu0 0.0
        %2279 = vmatpush1.msra.mxu0 0.0
        %2280 = vmatprep.mubr.f32.mxu0 0.0
        %2281 = vmatmul.mubr.f32.gmra.mrb[0].mxu0 %v2214
        %v2282 = vpop.f32.mrb[0].mxu0
        %v2283 = vadd.f32 0.0, %v2282
        %v2284 = vpop.f32.mrb[0].mxu0
        %v2285 = vadd.f32 0.0, %v2284
        %2286 = vdwg.mxu0
        %v2288 = vsel %vm947, %v2283, 0
        %v2291 = vsel %vm947, %v2285, 0
        %2293 = vmatprep.subr.mxu0 %v2291
        %2294 = vmatpush1.msra.mxu0 %v2288
        %2295 = vmatprep.subr.mxu0 0.0
        %2296 = vmatpush1.msra.mxu0 0.0
        %2297 = vmatprep.subr.mxu0 0.0
        %2298 = vmatpush1.msra.mxu0 0.0
        %2299 = vmatprep.subr.mxu0 0.0
        %2300 = vmatpush1.msra.mxu0 0.0
        %2301 = vmatprep.subr.mxu0 0.0
        %2302 = vmatpush1.msra.mxu0 0.0
        %2303 = vmatprep.subr.mxu0 0.0
        %2304 = vmatpush1.msra.mxu0 0.0
        %2305 = vmatprep.subr.mxu0 0.0
        %2306 = vmatpush1.msra.mxu0 0.0
        %2307 = vmatprep.subr.mxu0 0.0
        %2308 = vmatpush1.msra.mxu0 0.0
        %2309 = vmatprep.subr.mxu0 0.0
        %2310 = vmatpush1.msra.mxu0 0.0
        %2311 = vmatprep.subr.mxu0 0.0
        %2312 = vmatpush1.msra.mxu0 0.0
        %2313 = vmatprep.subr.mxu0 0.0
        %2314 = vmatpush1.msra.mxu0 0.0
        %2315 = vmatprep.subr.mxu0 0.0
        %2316 = vmatpush1.msra.mxu0 0.0
        %2317 = vmatprep.subr.mxu0 0.0
        %2318 = vmatpush1.msra.mxu0 0.0
        %2319 = vmatprep.subr.mxu0 0.0
        %2320 = vmatpush1.msra.mxu0 0.0
        %2321 = vmatprep.subr.mxu0 0.0
        %2322 = vmatpush1.msra.mxu0 0.0
        %2323 = vmatprep.subr.mxu0 0.0
        %2324 = vmatpush1.msra.mxu0 0.0
        %2325 = vmatprep.subr.mxu0 0.0
        %2326 = vmatpush1.msra.mxu0 0.0
        %2327 = vmatprep.subr.mxu0 0.0
        %2328 = vmatpush1.msra.mxu0 0.0
        %2329 = vmatprep.subr.mxu0 0.0
        %2330 = vmatpush1.msra.mxu0 0.0
        %2331 = vmatprep.subr.mxu0 0.0
        %2332 = vmatpush1.msra.mxu0 0.0
        %2333 = vmatprep.subr.mxu0 0.0
        %2334 = vmatpush1.msra.mxu0 0.0
        %2335 = vmatprep.subr.mxu0 0.0
        %2336 = vmatpush1.msra.mxu0 0.0
        %2337 = vmatprep.subr.mxu0 0.0
        %2338 = vmatpush1.msra.mxu0 0.0
        %2339 = vmatprep.subr.mxu0 0.0
        %2340 = vmatpush1.msra.mxu0 0.0
        %2341 = vmatprep.subr.mxu0 0.0
        %2342 = vmatpush1.msra.mxu0 0.0
        %2343 = vmatprep.subr.mxu0 0.0
        %2344 = vmatpush1.msra.mxu0 0.0
        %2345 = vmatprep.subr.mxu0 0.0
        %2346 = vmatpush1.msra.mxu0 0.0
        %2347 = vmatprep.subr.mxu0 0.0
        %2348 = vmatpush1.msra.mxu0 0.0
        %2349 = vmatprep.subr.mxu0 0.0
        %2350 = vmatpush1.msra.mxu0 0.0
        %2351 = vmatprep.subr.mxu0 0.0
        %2352 = vmatpush1.msra.mxu0 0.0
        %2353 = vmatprep.subr.mxu0 0.0
        %2354 = vmatpush1.msra.mxu0 0.0
        %2355 = vmatprep.subr.mxu0 0.0
        %2356 = vmatpush1.msra.mxu0 0.0
        %2357 = vmatprep.mubr.f32.mxu0 0.0
        %2358 = vmatmul.mubr.f32.gmra.mrb[0].mxu0 %v1513
        %v2359 = vpop.f32.mrb[0].mxu0
        %v2360 = vadd.f32 0.0, %v2359
        %v2361 = vpop.f32.mrb[0].mxu0
        %v2362 = vadd.f32 0.0, %v2361
        %2363 = vmatprep.mubr.f32.mxu0 0.0
        %2364 = vmatmul.mubr.f32.gmra.mrb[0].mxu0 %v1516
        %v2365 = vpop.f32.mrb[0].mxu0
        %v2366 = vadd.f32 0.0, %v2365
        %v2367 = vpop.f32.mrb[0].mxu0
        %v2368 = vadd.f32 0.0, %v2367
        %2369 = vmatprep.mubr.f32.mxu0 0.0
        %2370 = vmatmul.mubr.f32.gmra.mrb[0].mxu0 %v1519
        %v2371 = vpop.f32.mrb[0].mxu0
        %v2372 = vadd.f32 0.0, %v2371
        %v2373 = vpop.f32.mrb[0].mxu0
        %v2374 = vadd.f32 0.0, %v2373
        %2375 = vmatprep.mubr.f32.mxu0 0.0
        %2376 = vmatmul.mubr.f32.gmra.mrb[0].mxu0 %v1522
        %v2377 = vpop.f32.mrb[0].mxu0
        %v2378 = vadd.f32 0.0, %v2377
        %v2379 = vpop.f32.mrb[0].mxu0
        %v2380 = vadd.f32 0.0, %v2379
        %2381 = vmatprep.mubr.f32.mxu0 0.0
        %2382 = vmatmul.mubr.f32.gmra.mrb[0].mxu0 %v1525
        %v2383 = vpop.f32.mrb[0].mxu0
        %v2384 = vadd.f32 0.0, %v2383
        %v2385 = vpop.f32.mrb[0].mxu0
        %v2386 = vadd.f32 0.0, %v2385
        %2387 = vmatprep.mubr.f32.mxu0 0.0
        %2388 = vmatmul.mubr.f32.gmra.mrb[0].mxu0 %v1528
        %v2389 = vpop.f32.mrb[0].mxu0
        %v2390 = vadd.f32 0.0, %v2389
        %v2391 = vpop.f32.mrb[0].mxu0
        %v2392 = vadd.f32 0.0, %v2391
        %2393 = vmatprep.mubr.f32.mxu0 0.0
        %2394 = vmatmul.mubr.f32.gmra.mrb[0].mxu0 %v1531
        %v2395 = vpop.f32.mrb[0].mxu0
        %v2396 = vadd.f32 0.0, %v2395
        %v2397 = vpop.f32.mrb[0].mxu0
        %v2398 = vadd.f32 0.0, %v2397
        %2399 = vmatprep.mubr.f32.mxu0 0.0
        %2400 = vmatmul.mubr.f32.gmra.mrb[0].mxu0 %v1534
        %v2401 = vpop.f32.mrb[0].mxu0
        %v2402 = vadd.f32 0.0, %v2401
        %v2403 = vpop.f32.mrb[0].mxu0
        %v2404 = vadd.f32 0.0, %v2403
        %2405 = vmatprep.mubr.f32.mxu0 0.0
        %2406 = vmatmul.mubr.f32.gmra.mrb[0].mxu0 %v1537
        %v2407 = vpop.f32.mrb[0].mxu0
        %v2408 = vadd.f32 0.0, %v2407
        %v2409 = vpop.f32.mrb[0].mxu0
        %v2410 = vadd.f32 0.0, %v2409
        %2411 = vmatprep.mubr.f32.mxu0 0.0
        %2412 = vmatmul.mubr.f32.gmra.mrb[0].mxu0 %v1540
        %v2413 = vpop.f32.mrb[0].mxu0
        %v2414 = vadd.f32 0.0, %v2413
        %v2415 = vpop.f32.mrb[0].mxu0
        %v2416 = vadd.f32 0.0, %v2415
        %2417 = vmatprep.mubr.f32.mxu0 0.0
        %2418 = vmatmul.mubr.f32.gmra.mrb[0].mxu0 %v1543
        %v2419 = vpop.f32.mrb[0].mxu0
        %v2420 = vadd.f32 0.0, %v2419
        %v2421 = vpop.f32.mrb[0].mxu0
        %v2422 = vadd.f32 0.0, %v2421
        %2423 = vmatprep.mubr.f32.mxu0 0.0
        %2424 = vmatmul.mubr.f32.gmra.mrb[0].mxu0 %v1546
        %v2425 = vpop.f32.mrb[0].mxu0
        %v2426 = vadd.f32 0.0, %v2425
        %v2427 = vpop.f32.mrb[0].mxu0
        %v2428 = vadd.f32 0.0, %v2427
        %2429 = vmatprep.mubr.f32.mxu0 0.0
        %2430 = vmatmul.mubr.f32.gmra.mrb[0].mxu0 %v1549
        %v2431 = vpop.f32.mrb[0].mxu0
        %v2432 = vadd.f32 0.0, %v2431
        %v2433 = vpop.f32.mrb[0].mxu0
        %v2434 = vadd.f32 0.0, %v2433
        %2435 = vmatprep.mubr.f32.mxu0 0.0
        %2436 = vmatmul.mubr.f32.gmra.mrb[0].mxu0 %v1552
        %v2437 = vpop.f32.mrb[0].mxu0
        %v2438 = vadd.f32 0.0, %v2437
        %v2439 = vpop.f32.mrb[0].mxu0
        %v2440 = vadd.f32 0.0, %v2439
        %2441 = vmatprep.mubr.f32.mxu0 0.0
        %2442 = vmatmul.mubr.f32.gmra.mrb[0].mxu0 %v1555
        %v2443 = vpop.f32.mrb[0].mxu0
        %v2444 = vadd.f32 0.0, %v2443
        %v2445 = vpop.f32.mrb[0].mxu0
        %v2446 = vadd.f32 0.0, %v2445
        %2447 = vmatprep.mubr.f32.mxu0 0.0
        %2448 = vmatmul.mubr.f32.gmra.mrb[0].mxu0 %v1558
        %v2449 = vpop.f32.mrb[0].mxu0
        %v2450 = vadd.f32 0.0, %v2449
        %v2451 = vpop.f32.mrb[0].mxu0
        %v2452 = vadd.f32 0.0, %v2451
        %2453 = vdwg.mxu0
        %s2454 = scalar_lea.vmem %s533, 512 [#allocation14]
        %2455 = vst [vmem:[%s2454] sm:$0xff] %v2360
        %2456 = vst [vmem:[%s2454 + $0x8] sm:$0xff] %v2362
        %2457 = vst [vmem:[%s2454 + $0x10] sm:$0xff] %v2366
        %2458 = vst [vmem:[%s2454 + $0x18] sm:$0xff] %v2368
        %2459 = vst [vmem:[%s2454 + $0x20] sm:$0xff] %v2372
        %2460 = vst [vmem:[%s2454 + $0x28] sm:$0xff] %v2374
        %2461 = vst [vmem:[%s2454 + $0x30] sm:$0xff] %v2378
        %2462 = vst [vmem:[%s2454 + $0x38] sm:$0xff] %v2380
        %2463 = vst [vmem:[%s2454 + $0x40] sm:$0xff] %v2384
        %2464 = vst [vmem:[%s2454 + $0x48] sm:$0xff] %v2386
        %2465 = vst [vmem:[%s2454 + $0x50] sm:$0xff] %v2390
        %2466 = vst [vmem:[%s2454 + $0x58] sm:$0xff] %v2392
        %2467 = vst [vmem:[%s2454 + $0x60] sm:$0xff] %v2396
        %2468 = vst [vmem:[%s2454 + $0x68] sm:$0xff] %v2398
        %2469 = vst [vmem:[%s2454 + $0x70] sm:$0xff] %v2402
        %2470 = vst [vmem:[%s2454 + $0x78] sm:$0xff] %v2404
        %2471 = vst [vmem:[%s2454 + $0x80] sm:$0xff] %v2408
        %2472 = vst [vmem:[%s2454 + $0x88] sm:$0xff] %v2410
        %2473 = vst [vmem:[%s2454 + $0x90] sm:$0xff] %v2414
        %2474 = vst [vmem:[%s2454 + $0x98] sm:$0xff] %v2416
        %2475 = vst [vmem:[%s2454 + $0xa0] sm:$0xff] %v2420
        %2476 = vst [vmem:[%s2454 + $0xa8] sm:$0xff] %v2422
        %2477 = vst [vmem:[%s2454 + $0xb0] sm:$0xff] %v2426
        %2478 = vst [vmem:[%s2454 + $0xb8] sm:$0xff] %v2428
        %2479 = vst [vmem:[%s2454 + $0xc0] sm:$0xff] %v2432
        %2480 = vst [vmem:[%s2454 + $0xc8] sm:$0xff] %v2434
        %2481 = vst [vmem:[%s2454 + $0xd0] sm:$0xff] %v2438
        %2482 = vst [vmem:[%s2454 + $0xd8] sm:$0xff] %v2440
        %2483 = vst [vmem:[%s2454 + $0xe0] sm:$0xff] %v2444
        %2484 = vst [vmem:[%s2454 + $0xe8] sm:$0xff] %v2446
        %2485 = vst [vmem:[%s2454 + $0xf0] sm:$0xff] %v2450
        %2486 = vst [vmem:[%s2454 + $0xf8] sm:$0xff] %v2452
        %s2487 = sand.u32 %s294, 1
        %s2488 = scalar_lea.sflag [#allocation4], %s2487
        %s2489 = sand.u32 %s294, 1
        %s2490 = smul.addr %s2489, 768
        %s2491 = scalar_lea.vmem [#allocation14], %s2490
        %p2492 = scmp.lt.s32.totalorder %s35, 1
        %s2493 = scalar_select %p2492, %s35, 1
        %s2494 = smul.addr %s2493, 4
        %s2495 = scalar_lea.vmem %s12, %s2494
        // Predicated region
        $region93: #{small_deeplab_forward.1} parent=63 // pred_check
          %p2496 = pneg %p304
        $region94: #{small_deeplab_forward.1} parent=63 // pred_check_branch
          %2498 = sbr.rel (%p2496) target = $region96
        $region95: #{small_deeplab_forward.1} parent=63 // pred_region
          #allocation16 [shape = 'u32[6]{0}', space=smem, size = 0x18, scoped, tag = 'DMA stride descriptor']
          %s2499 = smul.u32 16, %s36
          %s2501 = ssub.s32 12288, 12288
          %2502 = vsyncadd %s2488, %s2501
          %s2503 = smul.addr %s2499, 2
          %s2504 = smul.addr %s35, 192
          %s2505 = sadd.s32 %s2503, %s2504
          %s2506 = smul.addr %s2505, 128
          %s2507 = scalar_lea.hbm %s11, %s2506
          %s2509 = sshll.u32 1, 14
          %s2510 = sxor.u32 4294967295, %s2509
          %s2513 = sshll.u32 7, 18
          %s2514 = sxor.u32 4294967295, %s2513
          %s2515 = sand.u32 0, %s2514
          %s2517 = sor.u32 %s2515, 0
          %s2519 = sshll.u32 3, 24
          %s2520 = sxor.u32 4294967295, %s2519
          %s2521 = sand.u32 %s2517, %s2520
          %s2523 = sor.u32 %s2521, 0
          %s2524 = sshll.u32 %s2491, 4
          %s2525 = int_to_ptr.vmem [resolvable:$true] %s2524
          %2531 = sst [smem:[#allocation16]] 4096
          %s2532 = scalar_lea.smem [#allocation16], 1
          %2533 = sst [smem:[%s2532]] 8192
          %s2534 = scalar_lea.smem [#allocation16], 2
          %2535 = sst [smem:[%s2534]] 16
          %s2536 = scalar_lea.smem [#allocation16], 3
          %2537 = sst [smem:[%s2536]] 256
          %s2538 = scalar_lea.smem [#allocation16], 4
          %2539 = sst [smem:[%s2538]] 256
          %s2540 = scalar_lea.smem [#allocation16], 5
          %2541 = sst [smem:[%s2540]] 16
          %2543 = dma.general %s2525, 12288, %s2507, %s2488, [#allocation15], [#allocation16], %s2523, 0
        $region96: #{small_deeplab_forward.1} parent=63 // pred_fallthru
          _
        // Predicated region
        $region97: #{small_deeplab_forward.1} parent=63 // pred_check
          %p2544 = pneg %p330
        $region98: #{small_deeplab_forward.1} parent=63 // pred_check_branch
          %2546 = sbr.rel (%p2544) target = $region100
        $region99: #{small_deeplab_forward.1} parent=63 // pred_region
          _
        $region100: #{small_deeplab_forward.1} parent=63 // pred_fallthru
          _
      $region64: #{small_deeplab_forward.1} parent=5 // pred_fallthru
        _
      %p2547 = scmp.le.s32.totalorder 2, %s26
      // Predicated region
      $region101: #{small_deeplab_forward.1} parent=5 // pred_check
        %p2548 = pneg %p2547
      $region102: #{small_deeplab_forward.1} parent=5 // pred_check_branch
        %2550 = sbr.rel (%p2548) target = $region104
      $region103: #{small_deeplab_forward.1} parent=5 // pred_region
        %s2551 = ssub.s32 %s26, 2
        // Predicated region
        $region105: #{small_deeplab_forward.1} parent=103 // pred_check
          %p2552 = pneg %p310
        $region106: #{small_deeplab_forward.1} parent=103 // pred_check_branch
          %2554 = sbr.rel (%p2552) target = $region108
        $region107: #{small_deeplab_forward.1} parent=103 // pred_region
          %s2555 = sand.u32 %s295, 1
          %s2556 = scalar_lea.sflag [#allocation4], %s2555
          %s2557 = sand.u32 %s295, 1
          %s2558 = smul.addr %s2557, 768
          %s2559 = scalar_lea.vmem [#allocation14], %s2558
          %2560 = dma.done %s2556, 12288
        $region108: #{small_deeplab_forward.1} parent=103 // pred_fallthru
          _
        // Predicated region
        $region109: #{small_deeplab_forward.1} parent=103 // pred_check
          %p2561 = pneg %p336
        $region110: #{small_deeplab_forward.1} parent=103 // pred_check_branch
          %2563 = sbr.rel (%p2561) target = $region112
        $region111: #{small_deeplab_forward.1} parent=103 // pred_region
          %p2564 = scmp.lt.s32.totalorder %s37, 1
          %s2565 = scalar_select %p2564, %s37, 1
          %s2566 = smul.addr %s2565, 4
          %s2567 = scalar_lea.vmem %s12, %s2566
        $region112: #{small_deeplab_forward.1} parent=103 // pred_fallthru
          _
      $region104: #{small_deeplab_forward.1} parent=5 // pred_fallthru
        _
    $region6: #{small_deeplab_forward.1} parent=1 // loop_footer
      %s30 = sadd.s32 1, %s26
    $region7: #{small_deeplab_forward.1} parent=1 // loop_footer_branch
      %25 = sbr.rel target = $region3
    $region8: #{small_deeplab_forward.1} parent=1 // loop_exit
      _
    %2568 = vsyncpa [#allocation3], 1
    %s2569 = scalar_lea.sflag [#allocation3], 1
    %2570 = vsyncpa %s2569, 1
    %2571 = vsyncpa [#allocation6], 1
    %2572 = vsyncpa [#allocation9], 1
    %2573 = vsyncpa [#allocation12], 1
    %2574 = vsyncpa [#allocation4], 1
    %s2575 = scalar_lea.sflag [#allocation4], 1
    %2576 = vsyncpa %s2575, 1

</llo_original>
